<compile_context>
chip_gen: v5e
topology: v5e:2x2
jax: 0.10.0
libtpu: 0.0.40
codegen_flags: <defaults>
</compile_context>

<pallas_src>
import functools
import numpy as np
import jax
import jax.numpy as jnp
from jax import lax
from jax.experimental import pallas as pl
from jax.experimental.pallas import tpu as pltpu


# ----------------------------------------------------------------------------
# In-kernel helpers
# ----------------------------------------------------------------------------
def _layernorm(x, g, b, eps=1e-5):
    m = jnp.mean(x, axis=-1, keepdims=True)
    c = x - m
    v = jnp.mean(c * c, axis=-1, keepdims=True)
    return c * lax.rsqrt(v + eps) * g + b


def _batchnorm_relu(x, g, b, eps=1e-5):
    # Two-pass (centered) variance over the batch axis (rows).
    m = jnp.mean(x, axis=0, keepdims=True)
    c = x - m
    v = jnp.mean(c * c, axis=0, keepdims=True)
    return jnp.maximum(c * lax.rsqrt(v + eps) * g + b, 0.0)


# ----------------------------------------------------------------------------
# Fused kernel: [encoder layer] x n_layers  ->  GIN (A@V + eps*V -> MLP w/ BN)
# Single program (no grid): everything stays resident in VMEM.
# ----------------------------------------------------------------------------
def make_fused_kernel(B, N, d_model, n_heads, d_k, d_v, d_ff,
                      hidden_dim, output_dim, n_layers):
    scale = 1.0 / np.sqrt(d_k)
    qkv_w = n_heads * (2 * d_k + d_v)

    def encoder(x, blk, neg_bias, wqkv_ref, wo_ref, wf1_ref, wf2_ref, vec_ref):
        # x: (B*N, d_model) f32; blk / neg_bias: (B*N, B*N) block-diag masks.
        vec = vec_ref[...]                                   # (8, W) packed vectors
        b_qkv = vec[0:1, :qkv_w]
        b_o = vec[1:2, :d_model]
        g_ln1, b_ln1 = vec[2:3, :d_model], vec[3:4, :d_model]
        b_f1 = vec[4:5, :d_ff]
        b_f2 = vec[5:6, :d_model]
        g_ln2, b_ln2 = vec[6:7, :d_model], vec[7:8, :d_model]

        # Fused QKV projection: one MXU push over the full (B*N) slab.
        qkv = jnp.dot(x, wqkv_ref[...],
                      preferred_element_type=jnp.float32) + b_qkv

        heads = []
        for h in range(n_heads):                             # static head loop
            q = qkv[:, h * d_k:(h + 1) * d_k]
            k = qkv[:, n_heads * d_k + h * d_k:
                       n_heads * d_k + (h + 1) * d_k]
            vv = qkv[:, 2 * n_heads * d_k + h * d_v:
                        2 * n_heads * d_k + (h + 1) * d_v]
            # One (B*N, B*N) score matmul; block-diagonal masking keeps each
            # graph's attention within its own N x N block.
            s = lax.dot_general(q, k, (((1,), (1,)), ((), ())),
                                preferred_element_type=jnp.float32) * scale
            s = s + neg_bias
            s = s - jnp.max(s, axis=-1, keepdims=True)
            p = jnp.exp(s) * blk                             # exact zeros off-block
            p = p * pl.reciprocal(jnp.sum(p, axis=-1, keepdims=True),
                                  approx=True)
            heads.append(jnp.dot(p, vv, preferred_element_type=jnp.float32))
        ctx = heads[0] if n_heads == 1 else jnp.concatenate(heads, axis=-1)

        attn = jnp.dot(ctx, wo_ref[...],
                       preferred_element_type=jnp.float32) + b_o
        y = _layernorm(attn + x, g_ln1, b_ln1)

        h1 = jnp.maximum(jnp.dot(y, wf1_ref[...],
                                 preferred_element_type=jnp.float32) + b_f1, 0.0)
        h2 = jnp.dot(h1, wf2_ref[...],
                     preferred_element_type=jnp.float32) + b_f2
        return _layernorm(h2 + y, g_ln2, b_ln2)

    def kernel(*refs):
        x_ref, abd_ref, blk_ref = refs[0], refs[1], refs[2]
        enc_refs = refs[3:3 + 5 * n_layers]
        gw1_ref, gw2_ref, gvec_ref = refs[3 + 5 * n_layers:6 + 5 * n_layers]
        out_ref = refs[6 + 5 * n_layers]

        blk = blk_ref[...]                                   # 1.0 in-block, 0.0 off
        neg_bias = (blk - 1.0) * 1e9                         # 0 in-block, -1e9 off

        x = x_ref[...]                                       # (B*N, d_model)
        for l in range(n_layers):                            # static layer loop
            x = encoder(x, blk, neg_bias, *enc_refs[5 * l:5 * (l + 1)])

        # ---- GIN: v_agg = A_bd @ V + eps * V, then Linear->BN->ReLU x2 ----
        gvec = gvec_ref[...]                                 # (8, W)
        eps = gvec[6:7, 0:1]                                 # (1, 1)
        agg = jnp.dot(abd_ref[...], x,
                      preferred_element_type=jnp.float32) + eps * x

        h = jnp.dot(agg, gw1_ref[...],
                    preferred_element_type=jnp.float32) + gvec[0:1, :hidden_dim]
        h = _batchnorm_relu(h, gvec[1:2, :hidden_dim], gvec[2:3, :hidden_dim])
        o = jnp.dot(h, gw2_ref[...],
                    preferred_element_type=jnp.float32) + gvec[3:4, :output_dim]
        o = _batchnorm_relu(o, gvec[4:5, :output_dim], gvec[5:6, :output_dim])
        out_ref[...] = o.astype(out_ref.dtype)

    return kernel


# ----------------------------------------------------------------------------
# Parameter packing (pure JAX, runs under the surrounding jit)
# ----------------------------------------------------------------------------
def _pad_row(v, width):
    return jnp.pad(v, ((0, 0), (0, width - v.shape[1])))


def _pack_encoder_params(params):
    (wq, bq, wk, bk, wv, bv, wo, bo, g1, be1, wf1, bf1, wf2, bf2, g2, be2) = params
    wqkv = jnp.concatenate([wq, wk, wv], axis=1)
    width = max(wqkv.shape[1], wf1.shape[1], wo.shape[1])
    vec = jnp.concatenate([
        _pad_row(jnp.concatenate([bq, bk, bv], axis=1), width),
        _pad_row(bo, width), _pad_row(g1, width), _pad_row(be1, width),
        _pad_row(bf1, width), _pad_row(bf2, width),
        _pad_row(g2, width), _pad_row(be2, width)], axis=0)       # (8, width)
    return [wqkv, wo, wf1, wf2, vec]


def _pack_gin_params(params):
    eps, w1, b1, g1, be1, w2, b2, g2, be2 = params
    width = max(w1.shape[1], w2.shape[1])
    eps_row = jnp.zeros((1, width), jnp.float32).at[0, 0].set(eps[0, 0])
    vec = jnp.concatenate([
        _pad_row(b1, width), _pad_row(g1, width), _pad_row(be1, width),
        _pad_row(b2, width), _pad_row(g2, width), _pad_row(be2, width),
        eps_row, jnp.zeros((1, width), jnp.float32)], axis=0)     # (8, width)
    return [w1, w2, vec]


# ----------------------------------------------------------------------------
# Full T_G_Block forward (single fused pallas_call)
# ----------------------------------------------------------------------------
@functools.partial(jax.jit, static_argnums=(4, 5, 6, 7))
def t_g_block_forward(v, a, enc_params_list, gin_params,
                      n_heads, d_k, d_v, output_dim):
    B, N, d_model = v.shape
    n_layers = len(enc_params_list)
    d_ff = enc_params_list[0][10].shape[1]
    hidden_dim = gin_params[1].shape[1]

    # Block-diagonal adjacency (B*N, B*N) and block membership mask (1/0).
    a_bd = jnp.einsum('bc,bij->bicj',
                      jnp.eye(B, dtype=jnp.float32),
                      a.astype(jnp.float32)).reshape(B * N, B * N)
    blk = jnp.kron(jnp.eye(B, dtype=jnp.float32),
                   jnp.ones((N, N), jnp.float32))                 # (B*N, B*N)

    packed = []
    for p in enc_params_list:
        packed += _pack_encoder_params(p)
    packed += _pack_gin_params(gin_params)

    inputs = [v.reshape(B * N, d_model), a_bd, blk] + packed
    vmem_spec = pl.BlockSpec(memory_space=pltpu.MemorySpace.VMEM)

    kernel = make_fused_kernel(B, N, d_model, n_heads, d_k, d_v, d_ff,
                               hidden_dim, output_dim, n_layers)
    out = pl.pallas_call(
        kernel,
        out_shape=jax.ShapeDtypeStruct((B * N, output_dim), v.dtype),
        in_specs=[vmem_spec] * len(inputs),
        out_specs=vmem_spec,
    )(*inputs)
    return out.reshape(B, N, output_dim)


# ----------------------------------------------------------------------------
# Pure-JAX reference (mirrors the PyTorch module exactly) for verification.
# ----------------------------------------------------------------------------
def ref_forward(v, a, enc_params_list, gin_params, n_heads, d_k, d_v):
    def ln(x, g, b):
        m = x.mean(-1, keepdims=True)
        var = ((x - m) ** 2).mean(-1, keepdims=True)
        return (x - m) / jnp.sqrt(var + 1e-5) * g + b

    out = v
    B, N, _ = v.shape
    for (wq, bq, wk, bk, wv, bv, wo, bo, g1, be1,
         wf1, bf1, wf2, bf2, g2, be2) in enc_params_list:
        q = (out @ wq + bq).reshape(B, N, n_heads, d_k).transpose(0, 2, 1, 3)
        k = (out @ wk + bk).reshape(B, N, n_heads, d_k).transpose(0, 2, 1, 3)
        vv = (out @ wv + bv).reshape(B, N, n_heads, d_v).transpose(0, 2, 1, 3)
        s = q @ jnp.swapaxes(k, -1, -2) / np.sqrt(d_k)
        p = jax.nn.softmax(s, axis=-1)
        ctx = (p @ vv).transpose(0, 2, 1, 3).reshape(B, N, n_heads * d_v)
        y = ln(ctx @ wo + bo + out, g1, be1)
        h = jnp.maximum(y @ wf1 + bf1, 0.0)
        out = ln(h @ wf2 + bf2 + y, g2, be2)

    eps, w1, b1, gg1, bb1, w2, b2, gg2, bb2 = gin_params
    agg = jnp.einsum('bij,bjc->bic', a, out) + eps[0, 0] * out
    x = agg.reshape(B * N, -1)
    h = x @ w1 + b1
    m = h.mean(0); var = ((h - m) ** 2).mean(0)
    h = jnp.maximum((h - m) / jnp.sqrt(var + 1e-5) * gg1 + bb1, 0.0)
    o = h @ w2 + b2
    m = o.mean(0); var = ((o - m) ** 2).mean(0)
    o = jnp.maximum((o - m) / jnp.sqrt(var + 1e-5) * gg2 + bb2, 0.0)
    return o.reshape(B, N, -1)


# ----------------------------------------------------------------------------
if __name__ == "__main__":
    # Small shapes consistent with the module.
    B, N = 2, 8
    input_dim = d_model = 16
    hidden_dim = 32
    output_dim = 16
    d_k = d_v = 8
    d_ff = 32
    n_heads = 1
    n_layers = 2

    key = jax.random.PRNGKey(0)

    def rnd(k, shape, scale=0.1):
        return (scale * jax.random.normal(k, shape)).astype(jnp.float32)

    # Deterministic parameter init (weights pre-transposed to (in, out)).
    enc_params_list = []
    for _ in range(n_layers):
        key, *ks = jax.random.split(key, 11)
        wq, bq = rnd(ks[0], (d_model, n_heads * d_k)), rnd(ks[1], (1, n_heads * d_k))
        wk, bk = rnd(ks[2], (d_model, n_heads * d_k)), rnd(ks[3], (1, n_heads * d_k))
        wv, bv = rnd(ks[4], (d_model, n_heads * d_v)), rnd(ks[5], (1, n_heads * d_v))
        wo, bo = rnd(ks[6], (n_heads * d_v, d_model)), rnd(ks[7], (1, d_model))
        g1, be1 = jnp.ones((1, d_model), jnp.float32), jnp.zeros((1, d_model), jnp.float32)
        wf1, bf1 = rnd(ks[8], (d_model, d_ff)), jnp.zeros((1, d_ff), jnp.float32)
        wf2, bf2 = rnd(ks[9], (d_ff, d_model)), jnp.zeros((1, d_model), jnp.float32)
        g2, be2 = jnp.ones((1, d_model), jnp.float32), jnp.zeros((1, d_model), jnp.float32)
        enc_params_list.append((wq, bq, wk, bk, wv, bv, wo, bo, g1, be1,
                                wf1, bf1, wf2, bf2, g2, be2))

    key, k1, k2, k3, k4 = jax.random.split(key, 5)
    gin_params = (
        jnp.full((1, 1), 0.25, jnp.float32),           # epsilon parameter
        rnd(k1, (input_dim, hidden_dim)), rnd(k2, (1, hidden_dim)),
        jnp.ones((1, hidden_dim), jnp.float32), jnp.zeros((1, hidden_dim), jnp.float32),
        rnd(k3, (hidden_dim, output_dim)), rnd(k4, (1, output_dim)),
        jnp.ones((1, output_dim), jnp.float32), jnp.zeros((1, output_dim), jnp.float32),
    )

    key, kv, ka = jax.random.split(key, 3)
    v = jax.random.normal(kv, (B, N, input_dim), jnp.float32)
    a = jax.random.normal(ka, (B, N, N), jnp.float32)

    out = t_g_block_forward(v, a, enc_params_list, gin_params,
                            n_heads, d_k, d_v, output_dim)
    out = jax.block_until_ready(out)

    ref = ref_forward(v, a, enc_params_list, gin_params, n_heads, d_k, d_v)
    assert out.shape == (B, N, output_dim)
    np.testing.assert_allclose(np.asarray(out), np.asarray(ref), rtol=1e-2, atol=1e-2)

    print("KERNEL_OK")
</pallas_src>

<mosaic_0001>
module attributes {stable_mosaic.version = 11 : i64} {
  func.func @kernel(%arg0: memref<16x16xf32, #tpu.memory_space<vmem>>, %arg1: memref<16x16xf32, #tpu.memory_space<vmem>>, %arg2: memref<16x16xf32, #tpu.memory_space<vmem>>, %arg3: memref<16x24xf32, #tpu.memory_space<vmem>>, %arg4: memref<8x16xf32, #tpu.memory_space<vmem>>, %arg5: memref<16x32xf32, #tpu.memory_space<vmem>>, %arg6: memref<32x16xf32, #tpu.memory_space<vmem>>, %arg7: memref<8x32xf32, #tpu.memory_space<vmem>>, %arg8: memref<16x24xf32, #tpu.memory_space<vmem>>, %arg9: memref<8x16xf32, #tpu.memory_space<vmem>>, %arg10: memref<16x32xf32, #tpu.memory_space<vmem>>, %arg11: memref<32x16xf32, #tpu.memory_space<vmem>>, %arg12: memref<8x32xf32, #tpu.memory_space<vmem>>, %arg13: memref<16x32xf32, #tpu.memory_space<vmem>>, %arg14: memref<32x16xf32, #tpu.memory_space<vmem>>, %arg15: memref<8x32xf32, #tpu.memory_space<vmem>>, %arg16: memref<16x16xf32, #tpu.memory_space<vmem>>) attributes {dimension_semantics = [], scalar_prefetch = 0 : i64, scratch_operands = 0 : i64, tpu.core_type = #tpu.core_type<tc>} {
    %c0 = arith.constant 0 : index
    %c0_0 = arith.constant 0 : index
    %0 = vector.load %arg2[%c0, %c0_0] : memref<16x16xf32, #tpu.memory_space<vmem>>, vector<16x16xf32>
    %cst = arith.constant 1.000000e+00 : f32
    %1 = vector.broadcast %cst : f32 to vector<16x16xf32>
    %2 = arith.subf %0, %1 : vector<16x16xf32>
    %cst_1 = arith.constant 1.000000e+09 : f32
    %3 = vector.broadcast %cst_1 : f32 to vector<16x16xf32>
    %4 = arith.mulf %2, %3 : vector<16x16xf32>
    %c0_2 = arith.constant 0 : index
    %c0_3 = arith.constant 0 : index
    %5 = vector.load %arg0[%c0_2, %c0_3] : memref<16x16xf32, #tpu.memory_space<vmem>>, vector<16x16xf32>
    %c0_4 = arith.constant 0 : index
    %c0_5 = arith.constant 0 : index
    %6 = vector.load %arg7[%c0_4, %c0_5] : memref<8x32xf32, #tpu.memory_space<vmem>>, vector<8x32xf32>
    %7 = vector.extract_strided_slice %6 {offsets = [0, 0], sizes = [1, 24], strides = [1, 1]} : vector<8x32xf32> to vector<1x24xf32>
    %8 = vector.extract_strided_slice %6 {offsets = [1, 0], sizes = [1, 16], strides = [1, 1]} : vector<8x32xf32> to vector<1x16xf32>
    %9 = vector.extract_strided_slice %6 {offsets = [2, 0], sizes = [1, 16], strides = [1, 1]} : vector<8x32xf32> to vector<1x16xf32>
    %10 = vector.extract_strided_slice %6 {offsets = [3, 0], sizes = [1, 16], strides = [1, 1]} : vector<8x32xf32> to vector<1x16xf32>
    %11 = vector.extract_strided_slice %6 {offsets = [4, 0], sizes = [1, 32], strides = [1, 1]} : vector<8x32xf32> to vector<1x32xf32>
    %12 = vector.extract_strided_slice %6 {offsets = [5, 0], sizes = [1, 16], strides = [1, 1]} : vector<8x32xf32> to vector<1x16xf32>
    %13 = vector.extract_strided_slice %6 {offsets = [6, 0], sizes = [1, 16], strides = [1, 1]} : vector<8x32xf32> to vector<1x16xf32>
    %14 = vector.extract_strided_slice %6 {offsets = [7, 0], sizes = [1, 16], strides = [1, 1]} : vector<8x32xf32> to vector<1x16xf32>
    %c0_6 = arith.constant 0 : index
    %c0_7 = arith.constant 0 : index
    %15 = vector.load %arg3[%c0_6, %c0_7] : memref<16x24xf32, #tpu.memory_space<vmem>>, vector<16x24xf32>
    %cst_8 = arith.constant dense<0.000000e+00> : vector<16x24xf32>
    %16 = tpu.matmul %5, %15, %cst_8 {dimension_numbers = #tpu.dot_dimension_numbers<[1], [0], [0], [1], [0, 0, 1, 1], [], []>} : vector<16x16xf32>, vector<16x24xf32>, vector<16x24xf32> -> vector<16x24xf32>
    %17 = vector.broadcast %7 : vector<1x24xf32> to vector<16x24xf32>
    %18 = arith.addf %16, %17 : vector<16x24xf32>
    %19 = vector.extract_strided_slice %18 {offsets = [0, 0], sizes = [16, 8], strides = [1, 1]} : vector<16x24xf32> to vector<16x8xf32>
    %20 = vector.extract_strided_slice %18 {offsets = [0, 8], sizes = [16, 8], strides = [1, 1]} : vector<16x24xf32> to vector<16x8xf32>
    %21 = vector.extract_strided_slice %18 {offsets = [0, 16], sizes = [16, 8], strides = [1, 1]} : vector<16x24xf32> to vector<16x8xf32>
    %cst_9 = arith.constant dense<0.000000e+00> : vector<16x16xf32>
    %22 = tpu.matmul %19, %20, %cst_9 {dimension_numbers = #tpu.dot_dimension_numbers<[1], [1], [0], [0], [0, 0, 1, 0], [], []>} : vector<16x8xf32>, vector<16x8xf32>, vector<16x16xf32> -> vector<16x16xf32>
    %cst_10 = arith.constant 0.353553385 : f32
    %23 = vector.broadcast %cst_10 : f32 to vector<16x16xf32>
    %24 = arith.mulf %22, %23 : vector<16x16xf32>
    %25 = arith.addf %24, %4 : vector<16x16xf32>
    %cst_11 = arith.constant dense<0xFF800000> : vector<16xf32>
    %26 = vector.multi_reduction <maximumf>, %25, %cst_11 [1] : vector<16x16xf32> to vector<16xf32>
    %27 = vector.shape_cast %26 : vector<16xf32> to vector<16x1xf32>
    %28 = vector.broadcast %27 : vector<16x1xf32> to vector<16x16xf32>
    %29 = arith.subf %25, %28 : vector<16x16xf32>
    %30 = math.exp %29 : vector<16x16xf32>
    %31 = arith.mulf %30, %0 : vector<16x16xf32>
    %cst_12 = arith.constant dense<0.000000e+00> : vector<16xf32>
    %32 = vector.multi_reduction <add>, %31, %cst_12 [1] : vector<16x16xf32> to vector<16xf32>
    %33 = vector.shape_cast %32 : vector<16xf32> to vector<16x1xf32>
    %34 = tpu.reciprocal %33 {approx = true} : vector<16x1xf32> -> vector<16x1xf32>
    %35 = vector.broadcast %34 : vector<16x1xf32> to vector<16x16xf32>
    %36 = arith.mulf %31, %35 : vector<16x16xf32>
    %cst_13 = arith.constant dense<0.000000e+00> : vector<16x8xf32>
    %37 = tpu.matmul %36, %21, %cst_13 {dimension_numbers = #tpu.dot_dimension_numbers<[1], [0], [0], [1], [0, 0, 1, 1], [], []>} : vector<16x16xf32>, vector<16x8xf32>, vector<16x8xf32> -> vector<16x8xf32>
    %c0_14 = arith.constant 0 : index
    %c0_15 = arith.constant 0 : index
    %38 = vector.load %arg4[%c0_14, %c0_15] : memref<8x16xf32, #tpu.memory_space<vmem>>, vector<8x16xf32>
    %cst_16 = arith.constant dense<0.000000e+00> : vector<16x16xf32>
    %39 = tpu.matmul %37, %38, %cst_16 {dimension_numbers = #tpu.dot_dimension_numbers<[1], [0], [0], [1], [0, 0, 1, 1], [], []>} : vector<16x8xf32>, vector<8x16xf32>, vector<16x16xf32> -> vector<16x16xf32>
    %40 = vector.broadcast %8 : vector<1x16xf32> to vector<16x16xf32>
    %41 = arith.addf %39, %40 : vector<16x16xf32>
    %42 = arith.addf %41, %5 : vector<16x16xf32>
    %cst_17 = arith.constant dense<0.000000e+00> : vector<16xf32>
    %43 = vector.multi_reduction <add>, %42, %cst_17 [1] : vector<16x16xf32> to vector<16xf32>
    %44 = vector.shape_cast %43 : vector<16xf32> to vector<16x1xf32>
    %cst_18 = arith.constant 1.600000e+01 : f32
    %45 = vector.broadcast %cst_18 : f32 to vector<16x1xf32>
    %46 = arith.divf %44, %45 : vector<16x1xf32>
    %47 = vector.broadcast %46 : vector<16x1xf32> to vector<16x16xf32>
    %48 = arith.subf %42, %47 : vector<16x16xf32>
    %49 = arith.mulf %48, %48 : vector<16x16xf32>
    %cst_19 = arith.constant dense<0.000000e+00> : vector<16xf32>
    %50 = vector.multi_reduction <add>, %49, %cst_19 [1] : vector<16x16xf32> to vector<16xf32>
    %51 = vector.shape_cast %50 : vector<16xf32> to vector<16x1xf32>
    %cst_20 = arith.constant 1.600000e+01 : f32
    %52 = vector.broadcast %cst_20 : f32 to vector<16x1xf32>
    %53 = arith.divf %51, %52 : vector<16x1xf32>
    %cst_21 = arith.constant 9.99999974E-6 : f32
    %54 = vector.broadcast %cst_21 : f32 to vector<16x1xf32>
    %55 = arith.addf %53, %54 : vector<16x1xf32>
    %56 = math.rsqrt %55 : vector<16x1xf32>
    %57 = vector.broadcast %56 : vector<16x1xf32> to vector<16x16xf32>
    %58 = arith.mulf %48, %57 : vector<16x16xf32>
    %59 = vector.broadcast %9 : vector<1x16xf32> to vector<16x16xf32>
    %60 = arith.mulf %58, %59 : vector<16x16xf32>
    %61 = vector.broadcast %10 : vector<1x16xf32> to vector<16x16xf32>
    %62 = arith.addf %60, %61 : vector<16x16xf32>
    %c0_22 = arith.constant 0 : index
    %c0_23 = arith.constant 0 : index
    %63 = vector.load %arg5[%c0_22, %c0_23] : memref<16x32xf32, #tpu.memory_space<vmem>>, vector<16x32xf32>
    %cst_24 = arith.constant dense<0.000000e+00> : vector<16x32xf32>
    %64 = tpu.matmul %62, %63, %cst_24 {dimension_numbers = #tpu.dot_dimension_numbers<[1], [0], [0], [1], [0, 0, 1, 1], [], []>} : vector<16x16xf32>, vector<16x32xf32>, vector<16x32xf32> -> vector<16x32xf32>
    %65 = vector.broadcast %11 : vector<1x32xf32> to vector<16x32xf32>
    %66 = arith.addf %64, %65 : vector<16x32xf32>
    %cst_25 = arith.constant 0.000000e+00 : f32
    %67 = vector.broadcast %cst_25 : f32 to vector<16x32xf32>
    %68 = arith.maximumf %66, %67 : vector<16x32xf32>
    %c0_26 = arith.constant 0 : index
    %c0_27 = arith.constant 0 : index
    %69 = vector.load %arg6[%c0_26, %c0_27] : memref<32x16xf32, #tpu.memory_space<vmem>>, vector<32x16xf32>
    %cst_28 = arith.constant dense<0.000000e+00> : vector<16x16xf32>
    %70 = tpu.matmul %68, %69, %cst_28 {dimension_numbers = #tpu.dot_dimension_numbers<[1], [0], [0], [1], [0, 0, 1, 1], [], []>} : vector<16x32xf32>, vector<32x16xf32>, vector<16x16xf32> -> vector<16x16xf32>
    %71 = vector.broadcast %12 : vector<1x16xf32> to vector<16x16xf32>
    %72 = arith.addf %70, %71 : vector<16x16xf32>
    %73 = arith.addf %72, %62 : vector<16x16xf32>
    %cst_29 = arith.constant dense<0.000000e+00> : vector<16xf32>
    %74 = vector.multi_reduction <add>, %73, %cst_29 [1] : vector<16x16xf32> to vector<16xf32>
    %75 = vector.shape_cast %74 : vector<16xf32> to vector<16x1xf32>
    %cst_30 = arith.constant 1.600000e+01 : f32
    %76 = vector.broadcast %cst_30 : f32 to vector<16x1xf32>
    %77 = arith.divf %75, %76 : vector<16x1xf32>
    %78 = vector.broadcast %77 : vector<16x1xf32> to vector<16x16xf32>
    %79 = arith.subf %73, %78 : vector<16x16xf32>
    %80 = arith.mulf %79, %79 : vector<16x16xf32>
    %cst_31 = arith.constant dense<0.000000e+00> : vector<16xf32>
    %81 = vector.multi_reduction <add>, %80, %cst_31 [1] : vector<16x16xf32> to vector<16xf32>
    %82 = vector.shape_cast %81 : vector<16xf32> to vector<16x1xf32>
    %cst_32 = arith.constant 1.600000e+01 : f32
    %83 = vector.broadcast %cst_32 : f32 to vector<16x1xf32>
    %84 = arith.divf %82, %83 : vector<16x1xf32>
    %cst_33 = arith.constant 9.99999974E-6 : f32
    %85 = vector.broadcast %cst_33 : f32 to vector<16x1xf32>
    %86 = arith.addf %84, %85 : vector<16x1xf32>
    %87 = math.rsqrt %86 : vector<16x1xf32>
    %88 = vector.broadcast %87 : vector<16x1xf32> to vector<16x16xf32>
    %89 = arith.mulf %79, %88 : vector<16x16xf32>
    %90 = vector.broadcast %13 : vector<1x16xf32> to vector<16x16xf32>
    %91 = arith.mulf %89, %90 : vector<16x16xf32>
    %92 = vector.broadcast %14 : vector<1x16xf32> to vector<16x16xf32>
    %93 = arith.addf %91, %92 : vector<16x16xf32>
    %c0_34 = arith.constant 0 : index
    %c0_35 = arith.constant 0 : index
    %94 = vector.load %arg12[%c0_34, %c0_35] : memref<8x32xf32, #tpu.memory_space<vmem>>, vector<8x32xf32>
    %95 = vector.extract_strided_slice %94 {offsets = [0, 0], sizes = [1, 24], strides = [1, 1]} : vector<8x32xf32> to vector<1x24xf32>
    %96 = vector.extract_strided_slice %94 {offsets = [1, 0], sizes = [1, 16], strides = [1, 1]} : vector<8x32xf32> to vector<1x16xf32>
    %97 = vector.extract_strided_slice %94 {offsets = [2, 0], sizes = [1, 16], strides = [1, 1]} : vector<8x32xf32> to vector<1x16xf32>
    %98 = vector.extract_strided_slice %94 {offsets = [3, 0], sizes = [1, 16], strides = [1, 1]} : vector<8x32xf32> to vector<1x16xf32>
    %99 = vector.extract_strided_slice %94 {offsets = [4, 0], sizes = [1, 32], strides = [1, 1]} : vector<8x32xf32> to vector<1x32xf32>
    %100 = vector.extract_strided_slice %94 {offsets = [5, 0], sizes = [1, 16], strides = [1, 1]} : vector<8x32xf32> to vector<1x16xf32>
    %101 = vector.extract_strided_slice %94 {offsets = [6, 0], sizes = [1, 16], strides = [1, 1]} : vector<8x32xf32> to vector<1x16xf32>
    %102 = vector.extract_strided_slice %94 {offsets = [7, 0], sizes = [1, 16], strides = [1, 1]} : vector<8x32xf32> to vector<1x16xf32>
    %c0_36 = arith.constant 0 : index
    %c0_37 = arith.constant 0 : index
    %103 = vector.load %arg8[%c0_36, %c0_37] : memref<16x24xf32, #tpu.memory_space<vmem>>, vector<16x24xf32>
    %cst_38 = arith.constant dense<0.000000e+00> : vector<16x24xf32>
    %104 = tpu.matmul %93, %103, %cst_38 {dimension_numbers = #tpu.dot_dimension_numbers<[1], [0], [0], [1], [0, 0, 1, 1], [], []>} : vector<16x16xf32>, vector<16x24xf32>, vector<16x24xf32> -> vector<16x24xf32>
    %105 = vector.broadcast %95 : vector<1x24xf32> to vector<16x24xf32>
    %106 = arith.addf %104, %105 : vector<16x24xf32>
    %107 = vector.extract_strided_slice %106 {offsets = [0, 0], sizes = [16, 8], strides = [1, 1]} : vector<16x24xf32> to vector<16x8xf32>
    %108 = vector.extract_strided_slice %106 {offsets = [0, 8], sizes = [16, 8], strides = [1, 1]} : vector<16x24xf32> to vector<16x8xf32>
    %109 = vector.extract_strided_slice %106 {offsets = [0, 16], sizes = [16, 8], strides = [1, 1]} : vector<16x24xf32> to vector<16x8xf32>
    %cst_39 = arith.constant dense<0.000000e+00> : vector<16x16xf32>
    %110 = tpu.matmul %107, %108, %cst_39 {dimension_numbers = #tpu.dot_dimension_numbers<[1], [1], [0], [0], [0, 0, 1, 0], [], []>} : vector<16x8xf32>, vector<16x8xf32>, vector<16x16xf32> -> vector<16x16xf32>
    %cst_40 = arith.constant 0.353553385 : f32
    %111 = vector.broadcast %cst_40 : f32 to vector<16x16xf32>
    %112 = arith.mulf %110, %111 : vector<16x16xf32>
    %113 = arith.addf %112, %4 : vector<16x16xf32>
    %cst_41 = arith.constant dense<0xFF800000> : vector<16xf32>
    %114 = vector.multi_reduction <maximumf>, %113, %cst_41 [1] : vector<16x16xf32> to vector<16xf32>
    %115 = vector.shape_cast %114 : vector<16xf32> to vector<16x1xf32>
    %116 = vector.broadcast %115 : vector<16x1xf32> to vector<16x16xf32>
    %117 = arith.subf %113, %116 : vector<16x16xf32>
    %118 = math.exp %117 : vector<16x16xf32>
    %119 = arith.mulf %118, %0 : vector<16x16xf32>
    %cst_42 = arith.constant dense<0.000000e+00> : vector<16xf32>
    %120 = vector.multi_reduction <add>, %119, %cst_42 [1] : vector<16x16xf32> to vector<16xf32>
    %121 = vector.shape_cast %120 : vector<16xf32> to vector<16x1xf32>
    %122 = tpu.reciprocal %121 {approx = true} : vector<16x1xf32> -> vector<16x1xf32>
    %123 = vector.broadcast %122 : vector<16x1xf32> to vector<16x16xf32>
    %124 = arith.mulf %119, %123 : vector<16x16xf32>
    %cst_43 = arith.constant dense<0.000000e+00> : vector<16x8xf32>
    %125 = tpu.matmul %124, %109, %cst_43 {dimension_numbers = #tpu.dot_dimension_numbers<[1], [0], [0], [1], [0, 0, 1, 1], [], []>} : vector<16x16xf32>, vector<16x8xf32>, vector<16x8xf32> -> vector<16x8xf32>
    %c0_44 = arith.constant 0 : index
    %c0_45 = arith.constant 0 : index
    %126 = vector.load %arg9[%c0_44, %c0_45] : memref<8x16xf32, #tpu.memory_space<vmem>>, vector<8x16xf32>
    %cst_46 = arith.constant dense<0.000000e+00> : vector<16x16xf32>
    %127 = tpu.matmul %125, %126, %cst_46 {dimension_numbers = #tpu.dot_dimension_numbers<[1], [0], [0], [1], [0, 0, 1, 1], [], []>} : vector<16x8xf32>, vector<8x16xf32>, vector<16x16xf32> -> vector<16x16xf32>
    %128 = vector.broadcast %96 : vector<1x16xf32> to vector<16x16xf32>
    %129 = arith.addf %127, %128 : vector<16x16xf32>
    %130 = arith.addf %129, %93 : vector<16x16xf32>
    %cst_47 = arith.constant dense<0.000000e+00> : vector<16xf32>
    %131 = vector.multi_reduction <add>, %130, %cst_47 [1] : vector<16x16xf32> to vector<16xf32>
    %132 = vector.shape_cast %131 : vector<16xf32> to vector<16x1xf32>
    %cst_48 = arith.constant 1.600000e+01 : f32
    %133 = vector.broadcast %cst_48 : f32 to vector<16x1xf32>
    %134 = arith.divf %132, %133 : vector<16x1xf32>
    %135 = vector.broadcast %134 : vector<16x1xf32> to vector<16x16xf32>
    %136 = arith.subf %130, %135 : vector<16x16xf32>
    %137 = arith.mulf %136, %136 : vector<16x16xf32>
    %cst_49 = arith.constant dense<0.000000e+00> : vector<16xf32>
    %138 = vector.multi_reduction <add>, %137, %cst_49 [1] : vector<16x16xf32> to vector<16xf32>
    %139 = vector.shape_cast %138 : vector<16xf32> to vector<16x1xf32>
    %cst_50 = arith.constant 1.600000e+01 : f32
    %140 = vector.broadcast %cst_50 : f32 to vector<16x1xf32>
    %141 = arith.divf %139, %140 : vector<16x1xf32>
    %cst_51 = arith.constant 9.99999974E-6 : f32
    %142 = vector.broadcast %cst_51 : f32 to vector<16x1xf32>
    %143 = arith.addf %141, %142 : vector<16x1xf32>
    %144 = math.rsqrt %143 : vector<16x1xf32>
    %145 = vector.broadcast %144 : vector<16x1xf32> to vector<16x16xf32>
    %146 = arith.mulf %136, %145 : vector<16x16xf32>
    %147 = vector.broadcast %97 : vector<1x16xf32> to vector<16x16xf32>
    %148 = arith.mulf %146, %147 : vector<16x16xf32>
    %149 = vector.broadcast %98 : vector<1x16xf32> to vector<16x16xf32>
    %150 = arith.addf %148, %149 : vector<16x16xf32>
    %c0_52 = arith.constant 0 : index
    %c0_53 = arith.constant 0 : index
    %151 = vector.load %arg10[%c0_52, %c0_53] : memref<16x32xf32, #tpu.memory_space<vmem>>, vector<16x32xf32>
    %cst_54 = arith.constant dense<0.000000e+00> : vector<16x32xf32>
    %152 = tpu.matmul %150, %151, %cst_54 {dimension_numbers = #tpu.dot_dimension_numbers<[1], [0], [0], [1], [0, 0, 1, 1], [], []>} : vector<16x16xf32>, vector<16x32xf32>, vector<16x32xf32> -> vector<16x32xf32>
    %153 = vector.broadcast %99 : vector<1x32xf32> to vector<16x32xf32>
    %154 = arith.addf %152, %153 : vector<16x32xf32>
    %cst_55 = arith.constant 0.000000e+00 : f32
    %155 = vector.broadcast %cst_55 : f32 to vector<16x32xf32>
    %156 = arith.maximumf %154, %155 : vector<16x32xf32>
    %c0_56 = arith.constant 0 : index
    %c0_57 = arith.constant 0 : index
    %157 = vector.load %arg11[%c0_56, %c0_57] : memref<32x16xf32, #tpu.memory_space<vmem>>, vector<32x16xf32>
    %cst_58 = arith.constant dense<0.000000e+00> : vector<16x16xf32>
    %158 = tpu.matmul %156, %157, %cst_58 {dimension_numbers = #tpu.dot_dimension_numbers<[1], [0], [0], [1], [0, 0, 1, 1], [], []>} : vector<16x32xf32>, vector<32x16xf32>, vector<16x16xf32> -> vector<16x16xf32>
    %159 = vector.broadcast %100 : vector<1x16xf32> to vector<16x16xf32>
    %160 = arith.addf %158, %159 : vector<16x16xf32>
    %161 = arith.addf %160, %150 : vector<16x16xf32>
    %cst_59 = arith.constant dense<0.000000e+00> : vector<16xf32>
    %162 = vector.multi_reduction <add>, %161, %cst_59 [1] : vector<16x16xf32> to vector<16xf32>
    %163 = vector.shape_cast %162 : vector<16xf32> to vector<16x1xf32>
    %cst_60 = arith.constant 1.600000e+01 : f32
    %164 = vector.broadcast %cst_60 : f32 to vector<16x1xf32>
    %165 = arith.divf %163, %164 : vector<16x1xf32>
    %166 = vector.broadcast %165 : vector<16x1xf32> to vector<16x16xf32>
    %167 = arith.subf %161, %166 : vector<16x16xf32>
    %168 = arith.mulf %167, %167 : vector<16x16xf32>
    %cst_61 = arith.constant dense<0.000000e+00> : vector<16xf32>
    %169 = vector.multi_reduction <add>, %168, %cst_61 [1] : vector<16x16xf32> to vector<16xf32>
    %170 = vector.shape_cast %169 : vector<16xf32> to vector<16x1xf32>
    %cst_62 = arith.constant 1.600000e+01 : f32
    %171 = vector.broadcast %cst_62 : f32 to vector<16x1xf32>
    %172 = arith.divf %170, %171 : vector<16x1xf32>
    %cst_63 = arith.constant 9.99999974E-6 : f32
    %173 = vector.broadcast %cst_63 : f32 to vector<16x1xf32>
    %174 = arith.addf %172, %173 : vector<16x1xf32>
    %175 = math.rsqrt %174 : vector<16x1xf32>
    %176 = vector.broadcast %175 : vector<16x1xf32> to vector<16x16xf32>
    %177 = arith.mulf %167, %176 : vector<16x16xf32>
    %178 = vector.broadcast %101 : vector<1x16xf32> to vector<16x16xf32>
    %179 = arith.mulf %177, %178 : vector<16x16xf32>
    %180 = vector.broadcast %102 : vector<1x16xf32> to vector<16x16xf32>
    %181 = arith.addf %179, %180 : vector<16x16xf32>
    %c0_64 = arith.constant 0 : index
    %c0_65 = arith.constant 0 : index
    %182 = vector.load %arg15[%c0_64, %c0_65] : memref<8x32xf32, #tpu.memory_space<vmem>>, vector<8x32xf32>
    %183 = vector.extract_strided_slice %182 {offsets = [6, 0], sizes = [1, 1], strides = [1, 1]} : vector<8x32xf32> to vector<1x1xf32>
    %c0_66 = arith.constant 0 : index
    %c0_67 = arith.constant 0 : index
    %184 = vector.load %arg1[%c0_66, %c0_67] : memref<16x16xf32, #tpu.memory_space<vmem>>, vector<16x16xf32>
    %cst_68 = arith.constant dense<0.000000e+00> : vector<16x16xf32>
    %185 = tpu.matmul %184, %181, %cst_68 {dimension_numbers = #tpu.dot_dimension_numbers<[1], [0], [0], [1], [0, 0, 1, 1], [], []>} : vector<16x16xf32>, vector<16x16xf32>, vector<16x16xf32> -> vector<16x16xf32>
    %186 = vector.broadcast %183 : vector<1x1xf32> to vector<16x16xf32>
    %187 = arith.mulf %186, %181 : vector<16x16xf32>
    %188 = arith.addf %185, %187 : vector<16x16xf32>
    %c0_69 = arith.constant 0 : index
    %c0_70 = arith.constant 0 : index
    %189 = vector.load %arg13[%c0_69, %c0_70] : memref<16x32xf32, #tpu.memory_space<vmem>>, vector<16x32xf32>
    %cst_71 = arith.constant dense<0.000000e+00> : vector<16x32xf32>
    %190 = tpu.matmul %188, %189, %cst_71 {dimension_numbers = #tpu.dot_dimension_numbers<[1], [0], [0], [1], [0, 0, 1, 1], [], []>} : vector<16x16xf32>, vector<16x32xf32>, vector<16x32xf32> -> vector<16x32xf32>
    %191 = vector.extract_strided_slice %182 {offsets = [0, 0], sizes = [1, 32], strides = [1, 1]} : vector<8x32xf32> to vector<1x32xf32>
    %192 = vector.broadcast %191 : vector<1x32xf32> to vector<16x32xf32>
    %193 = arith.addf %190, %192 : vector<16x32xf32>
    %194 = vector.extract_strided_slice %182 {offsets = [1, 0], sizes = [1, 32], strides = [1, 1]} : vector<8x32xf32> to vector<1x32xf32>
    %195 = vector.extract_strided_slice %182 {offsets = [2, 0], sizes = [1, 32], strides = [1, 1]} : vector<8x32xf32> to vector<1x32xf32>
    %cst_72 = arith.constant dense<0.000000e+00> : vector<32xf32>
    %196 = vector.multi_reduction <add>, %193, %cst_72 [0] : vector<16x32xf32> to vector<32xf32>
    %197 = vector.shape_cast %196 : vector<32xf32> to vector<1x32xf32>
    %cst_73 = arith.constant 1.600000e+01 : f32
    %198 = vector.broadcast %cst_73 : f32 to vector<1x32xf32>
    %199 = arith.divf %197, %198 : vector<1x32xf32>
    %200 = vector.broadcast %199 : vector<1x32xf32> to vector<16x32xf32>
    %201 = arith.subf %193, %200 : vector<16x32xf32>
    %202 = arith.mulf %201, %201 : vector<16x32xf32>
    %cst_74 = arith.constant dense<0.000000e+00> : vector<32xf32>
    %203 = vector.multi_reduction <add>, %202, %cst_74 [0] : vector<16x32xf32> to vector<32xf32>
    %204 = vector.shape_cast %203 : vector<32xf32> to vector<1x32xf32>
    %cst_75 = arith.constant 1.600000e+01 : f32
    %205 = vector.broadcast %cst_75 : f32 to vector<1x32xf32>
    %206 = arith.divf %204, %205 : vector<1x32xf32>
    %cst_76 = arith.constant 9.99999974E-6 : f32
    %207 = vector.broadcast %cst_76 : f32 to vector<1x32xf32>
    %208 = arith.addf %206, %207 : vector<1x32xf32>
    %209 = math.rsqrt %208 : vector<1x32xf32>
    %210 = vector.broadcast %209 : vector<1x32xf32> to vector<16x32xf32>
    %211 = arith.mulf %201, %210 : vector<16x32xf32>
    %212 = vector.broadcast %194 : vector<1x32xf32> to vector<16x32xf32>
    %213 = arith.mulf %211, %212 : vector<16x32xf32>
    %214 = vector.broadcast %195 : vector<1x32xf32> to vector<16x32xf32>
    %215 = arith.addf %213, %214 : vector<16x32xf32>
    %cst_77 = arith.constant 0.000000e+00 : f32
    %216 = vector.broadcast %cst_77 : f32 to vector<16x32xf32>
    %217 = arith.maximumf %215, %216 : vector<16x32xf32>
    %c0_78 = arith.constant 0 : index
    %c0_79 = arith.constant 0 : index
    %218 = vector.load %arg14[%c0_78, %c0_79] : memref<32x16xf32, #tpu.memory_space<vmem>>, vector<32x16xf32>
    %cst_80 = arith.constant dense<0.000000e+00> : vector<16x16xf32>
    %219 = tpu.matmul %217, %218, %cst_80 {dimension_numbers = #tpu.dot_dimension_numbers<[1], [0], [0], [1], [0, 0, 1, 1], [], []>} : vector<16x32xf32>, vector<32x16xf32>, vector<16x16xf32> -> vector<16x16xf32>
    %220 = vector.extract_strided_slice %182 {offsets = [3, 0], sizes = [1, 16], strides = [1, 1]} : vector<8x32xf32> to vector<1x16xf32>
    %221 = vector.broadcast %220 : vector<1x16xf32> to vector<16x16xf32>
    %222 = arith.addf %219, %221 : vector<16x16xf32>
    %223 = vector.extract_strided_slice %182 {offsets = [4, 0], sizes = [1, 16], strides = [1, 1]} : vector<8x32xf32> to vector<1x16xf32>
    %224 = vector.extract_strided_slice %182 {offsets = [5, 0], sizes = [1, 16], strides = [1, 1]} : vector<8x32xf32> to vector<1x16xf32>
    %cst_81 = arith.constant dense<0.000000e+00> : vector<16xf32>
    %225 = vector.multi_reduction <add>, %222, %cst_81 [0] : vector<16x16xf32> to vector<16xf32>
    %226 = vector.shape_cast %225 : vector<16xf32> to vector<1x16xf32>
    %cst_82 = arith.constant 1.600000e+01 : f32
    %227 = vector.broadcast %cst_82 : f32 to vector<1x16xf32>
    %228 = arith.divf %226, %227 : vector<1x16xf32>
    %229 = vector.broadcast %228 : vector<1x16xf32> to vector<16x16xf32>
    %230 = arith.subf %222, %229 : vector<16x16xf32>
    %231 = arith.mulf %230, %230 : vector<16x16xf32>
    %cst_83 = arith.constant dense<0.000000e+00> : vector<16xf32>
    %232 = vector.multi_reduction <add>, %231, %cst_83 [0] : vector<16x16xf32> to vector<16xf32>
    %233 = vector.shape_cast %232 : vector<16xf32> to vector<1x16xf32>
    %cst_84 = arith.constant 1.600000e+01 : f32
    %234 = vector.broadcast %cst_84 : f32 to vector<1x16xf32>
    %235 = arith.divf %233, %234 : vector<1x16xf32>
    %cst_85 = arith.constant 9.99999974E-6 : f32
    %236 = vector.broadcast %cst_85 : f32 to vector<1x16xf32>
    %237 = arith.addf %235, %236 : vector<1x16xf32>
    %238 = math.rsqrt %237 : vector<1x16xf32>
    %239 = vector.broadcast %238 : vector<1x16xf32> to vector<16x16xf32>
    %240 = arith.mulf %230, %239 : vector<16x16xf32>
    %241 = vector.broadcast %223 : vector<1x16xf32> to vector<16x16xf32>
    %242 = arith.mulf %240, %241 : vector<16x16xf32>
    %243 = vector.broadcast %224 : vector<1x16xf32> to vector<16x16xf32>
    %244 = arith.addf %242, %243 : vector<16x16xf32>
    %cst_86 = arith.constant 0.000000e+00 : f32
    %245 = vector.broadcast %cst_86 : f32 to vector<16x16xf32>
    %246 = arith.maximumf %244, %245 : vector<16x16xf32>
    %c0_87 = arith.constant 0 : index
    %c0_88 = arith.constant 0 : index
    %247 = vector.load %arg16[%c0_87, %c0_88] : memref<16x16xf32, #tpu.memory_space<vmem>>, vector<16x16xf32>
    tpu.vector_store %arg16[%c0_87, %c0_88], %246 {strides = array<i32>} : memref<16x16xf32, #tpu.memory_space<vmem>>, vector<16x16xf32>,
    return
  }
}

</mosaic_0001>

<llo_original>
// kernel: t_g_block_forward.1
$region0: #{t_g_block_forward.1}
  #allocation0 [shape = 'u32[]', space=smem, size = 0x4, offset = 0x4, fixed_abs, tag = 'smem constant byte address 0x4 - core index']
  #allocation1 [shape = 'u32[72,128]{1,0:T(1,128)}', space=vmem, size = 0x9000, scoped, tag = 'internal scratch']
  %s0 = inlined_call_operand.vmem [shape: f32[16,16], index: 0, kind: input, shape index: {}]
  %s1 = inlined_call_operand.vmem [shape: f32[16,16], index: 1, kind: input, shape index: {}]
  %s2 = inlined_call_operand.vmem [shape: f32[16,16], index: 2, kind: input, shape index: {}]
  %s3 = inlined_call_operand.vmem [shape: f32[16,24], index: 3, kind: input, shape index: {}]
  %s4 = inlined_call_operand.vmem [shape: f32[8,16], index: 4, kind: input, shape index: {}]
  %s5 = inlined_call_operand.vmem [shape: f32[16,32], index: 5, kind: input, shape index: {}]
  %s6 = inlined_call_operand.vmem [shape: f32[32,16], index: 6, kind: input, shape index: {}]
  %s7 = inlined_call_operand.vmem [shape: f32[8,32], index: 7, kind: input, shape index: {}]
  %s8 = inlined_call_operand.vmem [shape: f32[16,24], index: 8, kind: input, shape index: {}]
  %s9 = inlined_call_operand.vmem [shape: f32[8,16], index: 9, kind: input, shape index: {}]
  %s10 = inlined_call_operand.vmem [shape: f32[16,32], index: 10, kind: input, shape index: {}]
  %s11 = inlined_call_operand.vmem [shape: f32[32,16], index: 11, kind: input, shape index: {}]
  %s12 = inlined_call_operand.vmem [shape: f32[8,32], index: 12, kind: input, shape index: {}]
  %s13 = inlined_call_operand.vmem [shape: f32[16,32], index: 13, kind: input, shape index: {}]
  %s14 = inlined_call_operand.vmem [shape: f32[32,16], index: 14, kind: input, shape index: {}]
  %s15 = inlined_call_operand.vmem [shape: f32[8,32], index: 15, kind: input, shape index: {}]
  %s16 = inlined_call_operand.hbm [shape: f32[16,16], index: 16, kind: output, shape index: {}]
  %s17 = sld [smem:[#allocation0]]
  $region74: #{t_g_block_forward.1} parent=0
    _
  %s19 = ssub.s32 1, %s17
  %s20 = scalar_select 0, %s19, %s17
  $region1: #{t_g_block_forward.1} parent=0
    #allocation2 [shape = 'u8[8192]{0}', space=vmem, size = 0x2000, scoped, tag = 'output window, operand 0, single buffered']
    #allocation3 [shape = 's32[1]{0}', space=sflag, size = 0x4, scoped, tag = 'scoped memory for t_g_block_forward.1']
    %21 = vsyncpa [#allocation3], 0
    // Predicated region
    $region2: #{t_g_block_forward.1} parent=1 // pred_check
      _
    $region3: #{t_g_block_forward.1} parent=1 // pred_check_branch
      %23 = sbr.rel (0) target = $region5
    $region4: #{t_g_block_forward.1} parent=1 // pred_region
      _
    $region5: #{t_g_block_forward.1} parent=1 // pred_fallthru
      _
    // Predicated region
    $region6: #{t_g_block_forward.1} parent=1 // pred_check
      _
    $region7: #{t_g_block_forward.1} parent=1 // pred_check_branch
      %25 = sbr.rel (0) target = $region9
    $region8: #{t_g_block_forward.1} parent=1 // pred_region
      _
    $region9: #{t_g_block_forward.1} parent=1 // pred_fallthru
      _
    // Predicated region
    $region10: #{t_g_block_forward.1} parent=1 // pred_check
      _
    $region11: #{t_g_block_forward.1} parent=1 // pred_check_branch
      %27 = sbr.rel (0) target = $region13
    $region12: #{t_g_block_forward.1} parent=1 // pred_region
      _
    $region13: #{t_g_block_forward.1} parent=1 // pred_fallthru
      _
    // Predicated region
    $region14: #{t_g_block_forward.1} parent=1 // pred_check
      _
    $region15: #{t_g_block_forward.1} parent=1 // pred_check_branch
      %29 = sbr.rel (0) target = $region17
    $region16: #{t_g_block_forward.1} parent=1 // pred_region
      _
    $region17: #{t_g_block_forward.1} parent=1 // pred_fallthru
      _
    // Predicated region
    $region18: #{t_g_block_forward.1} parent=1 // pred_check
      _
    $region19: #{t_g_block_forward.1} parent=1 // pred_check_branch
      %31 = sbr.rel (0) target = $region21
    $region20: #{t_g_block_forward.1} parent=1 // pred_region
      _
    $region21: #{t_g_block_forward.1} parent=1 // pred_fallthru
      _
    // Predicated region
    $region22: #{t_g_block_forward.1} parent=1 // pred_check
      _
    $region23: #{t_g_block_forward.1} parent=1 // pred_check_branch
      %33 = sbr.rel (0) target = $region25
    $region24: #{t_g_block_forward.1} parent=1 // pred_region
      _
    $region25: #{t_g_block_forward.1} parent=1 // pred_fallthru
      _
    // Predicated region
    $region26: #{t_g_block_forward.1} parent=1 // pred_check
      _
    $region27: #{t_g_block_forward.1} parent=1 // pred_check_branch
      %35 = sbr.rel (0) target = $region29
    $region28: #{t_g_block_forward.1} parent=1 // pred_region
      _
    $region29: #{t_g_block_forward.1} parent=1 // pred_fallthru
      _
    // Predicated region
    $region30: #{t_g_block_forward.1} parent=1 // pred_check
      _
    $region31: #{t_g_block_forward.1} parent=1 // pred_check_branch
      %37 = sbr.rel (0) target = $region33
    $region32: #{t_g_block_forward.1} parent=1 // pred_region
      _
    $region33: #{t_g_block_forward.1} parent=1 // pred_fallthru
      _
    // Predicated region
    $region34: #{t_g_block_forward.1} parent=1 // pred_check
      _
    $region35: #{t_g_block_forward.1} parent=1 // pred_check_branch
      %39 = sbr.rel (0) target = $region37
    $region36: #{t_g_block_forward.1} parent=1 // pred_region
      _
    $region37: #{t_g_block_forward.1} parent=1 // pred_fallthru
      _
    // Predicated region
    $region38: #{t_g_block_forward.1} parent=1 // pred_check
      _
    $region39: #{t_g_block_forward.1} parent=1 // pred_check_branch
      %41 = sbr.rel (0) target = $region41
    $region40: #{t_g_block_forward.1} parent=1 // pred_region
      _
    $region41: #{t_g_block_forward.1} parent=1 // pred_fallthru
      _
    // Predicated region
    $region42: #{t_g_block_forward.1} parent=1 // pred_check
      _
    $region43: #{t_g_block_forward.1} parent=1 // pred_check_branch
      %43 = sbr.rel (0) target = $region45
    $region44: #{t_g_block_forward.1} parent=1 // pred_region
      _
    $region45: #{t_g_block_forward.1} parent=1 // pred_fallthru
      _
    // Predicated region
    $region46: #{t_g_block_forward.1} parent=1 // pred_check
      _
    $region47: #{t_g_block_forward.1} parent=1 // pred_check_branch
      %45 = sbr.rel (0) target = $region49
    $region48: #{t_g_block_forward.1} parent=1 // pred_region
      _
    $region49: #{t_g_block_forward.1} parent=1 // pred_fallthru
      _
    // Predicated region
    $region50: #{t_g_block_forward.1} parent=1 // pred_check
      _
    $region51: #{t_g_block_forward.1} parent=1 // pred_check_branch
      %47 = sbr.rel (0) target = $region53
    $region52: #{t_g_block_forward.1} parent=1 // pred_region
      _
    $region53: #{t_g_block_forward.1} parent=1 // pred_fallthru
      _
    // Predicated region
    $region54: #{t_g_block_forward.1} parent=1 // pred_check
      _
    $region55: #{t_g_block_forward.1} parent=1 // pred_check_branch
      %49 = sbr.rel (0) target = $region57
    $region56: #{t_g_block_forward.1} parent=1 // pred_region
      _
    $region57: #{t_g_block_forward.1} parent=1 // pred_fallthru
      _
    // Predicated region
    $region58: #{t_g_block_forward.1} parent=1 // pred_check
      _
    $region59: #{t_g_block_forward.1} parent=1 // pred_check_branch
      %51 = sbr.rel (0) target = $region61
    $region60: #{t_g_block_forward.1} parent=1 // pred_region
      _
    $region61: #{t_g_block_forward.1} parent=1 // pred_fallthru
      _
    // Predicated region
    $region62: #{t_g_block_forward.1} parent=1 // pred_check
      _
    $region63: #{t_g_block_forward.1} parent=1 // pred_check_branch
      %53 = sbr.rel (0) target = $region65
    $region64: #{t_g_block_forward.1} parent=1 // pred_region
      _
    $region65: #{t_g_block_forward.1} parent=1 // pred_fallthru
      _
    %v54 = vld [vmem:[%s2] sm:$0xff]
    %v55 = vld [vmem:[%s2 + $0x8] sm:$0xff]
    %v56 = vsub.f32 %v54, 1.0
    %v57 = vsub.f32 %v55, 1.0
    %v58 = vmul.f32 %v56, 1e+09
    %v59 = vmul.f32 %v57, 1e+09
    %v60 = vld [vmem:[%s0] sm:$0xff]
    %v61 = vld [vmem:[%s0 + $0x8] sm:$0xff]
    %v62 = vld [vmem:[%s7] sm:$0xff]
    %v63 = vld [vmem:[%s3] sm:$0xff]
    %v64 = vld [vmem:[%s3 + $0x8] sm:$0xff]
    %v65 = vperm.slane %v62, 0
    %vm66 = vcmask 130048
    %v68 = vsel %vm66, %v60, 0
    %v71 = vsel %vm66, %v61, 0
    %73 = vmatpush.msra.mxu0 0.0
    %74 = vmatpush.msra.mxu0 0.0
    %75 = vmatpush.msra.mxu0 0.0
    %76 = vmatpush.msra.mxu0 0.0
    %77 = vmatpush.msra.mxu0 0.0
    %78 = vmatpush.msra.mxu0 0.0
    %79 = vmatpush.msra.mxu0 0.0
    %80 = vmatpush.msra.mxu0 0.0
    %81 = vmatpush.msra.mxu0 0.0
    %82 = vmatpush.msra.mxu0 0.0
    %83 = vmatpush.msra.mxu0 0.0
    %84 = vmatpush.msra.mxu0 0.0
    %85 = vmatpush.msra.mxu0 0.0
    %86 = vmatpush.msra.mxu0 0.0
    %87 = vmatpush.msra.mxu0 %v64
    %88 = vmatpush.msra.mxu0 %v63
    %89 = vmatmul.f32.gmra.mxu0 %v68
    %v90 = vpop.f32.mrf.mxu0
    %v91 = vadd.f32 %v65, %v90
    %92 = vmatmul.f32.gmra.mxu0 %v71
    %v93 = vpop.f32.mrf.mxu0
    %v94 = vadd.f32 %v65, %v93
    %95 = vdwg.mxu0
    %98 = vrot.lane.b32.xlu0 %v91, 120
    %v99 = vpop.permute.xlu0 %98
    %100 = vrot.lane.b32.xlu0 %v94, 120
    %v101 = vpop.permute.xlu0 %100
    %vm102 = vcmask 64512
    %v103 = vsel %vm102, %v91, 0
    %v105 = vsel %vm102, %v94, 0
    %v107 = vsel %vm102, %v99, 0
    %v109 = vsel %vm102, %v101, 0
    %111 = vmatpush.xpose.msra.mxu0 0.0
    %112 = vmatpush.xpose.msra.mxu0 0.0
    %113 = vmatpush.xpose.msra.mxu0 0.0
    %114 = vmatpush.xpose.msra.mxu0 0.0
    %115 = vmatpush.xpose.msra.mxu0 0.0
    %116 = vmatpush.xpose.msra.mxu0 0.0
    %117 = vmatpush.xpose.msra.mxu0 0.0
    %118 = vmatpush.xpose.msra.mxu0 0.0
    %119 = vmatpush.xpose.msra.mxu0 0.0
    %120 = vmatpush.xpose.msra.mxu0 0.0
    %121 = vmatpush.xpose.msra.mxu0 0.0
    %122 = vmatpush.xpose.msra.mxu0 0.0
    %123 = vmatpush.xpose.msra.mxu0 0.0
    %124 = vmatpush.xpose.msra.mxu0 0.0
    %125 = vmatpush.xpose.msra.mxu0 %v109
    %126 = vmatpush.xpose.msra.mxu0 %v107
    %127 = vmatmul.f32.gmra.mxu0 %v103
    %v128 = vpop.f32.mrf.mxu0
    %v129 = vadd.f32 0.0, %v128
    %130 = vmatmul.f32.gmra.mxu0 %v105
    %v131 = vpop.f32.mrf.mxu0
    %v132 = vadd.f32 0.0, %v131
    %133 = vdwg.mxu0
    %v134 = vmul.f32 %v129, 0.35355338
    %v135 = vmul.f32 %v132, 0.35355338
    %v136 = vadd.f32 %v134, %v58
    %v137 = vadd.f32 %v135, %v59
    %v138 = vsel %vm66, %v136, -inf
    %139 = vmax.xlane.f32.xlu0 %v138
    %v140 = vpop.xlane.xlu0 %139
    %v141 = vsel %vm66, %v137, -inf
    %142 = vmax.xlane.f32.xlu0 %v141
    %v143 = vpop.xlane.xlu0 %142
    %v144 = vsub.f32 %v136, %v140
    %v145 = vsub.f32 %v137, %v143
    %v146 = vmul.f32 %v144, 1.442695
    %v147 = vpow.pop %v146
    %v148 = vmul.f32 %v145, 1.442695
    %v149 = vpow.pop %v148
    %v150 = vmul.f32 %v147, %v54
    %v151 = vmul.f32 %v149, %v55
    %v152 = vsel %vm66, %v150, 0.0
    %153 = vadd.xlane.f32.xlu0 %v152
    %v154 = vpop.xlane.xlu0 %153
    %v155 = vsel %vm66, %v151, 0.0
    %156 = vadd.xlane.f32.xlu0 %v155
    %v157 = vpop.xlane.xlu0 %156
    %v158 = vrcp.pop %v154
    %v159 = vrcp.pop %v157
    %v160 = vmul.f32 %v150, %v158
    %v161 = vmul.f32 %v151, %v159
    %162 = vrot.lane.b32.xlu0 %v91, 112
    %v163 = vpop.permute.xlu0 %162
    %164 = vrot.lane.b32.xlu0 %v94, 112
    %v165 = vpop.permute.xlu0 %164
    %v169 = vsel %vm66, %v160, 0
    %v172 = vsel %vm66, %v161, 0
    %174 = vmatpush.msra.mxu0 0.0
    %175 = vmatpush.msra.mxu0 0.0
    %176 = vmatpush.msra.mxu0 0.0
    %177 = vmatpush.msra.mxu0 0.0
    %178 = vmatpush.msra.mxu0 0.0
    %179 = vmatpush.msra.mxu0 0.0
    %180 = vmatpush.msra.mxu0 0.0
    %181 = vmatpush.msra.mxu0 0.0
    %182 = vmatpush.msra.mxu0 0.0
    %183 = vmatpush.msra.mxu0 0.0
    %184 = vmatpush.msra.mxu0 0.0
    %185 = vmatpush.msra.mxu0 0.0
    %186 = vmatpush.msra.mxu0 0.0
    %187 = vmatpush.msra.mxu0 0.0
    %188 = vmatpush.msra.mxu0 %v165
    %189 = vmatpush.msra.mxu0 %v163
    %190 = vmatmul.f32.gmra.mxu0 %v169
    %v191 = vpop.f32.mrf.mxu0
    %v192 = vadd.f32 0.0, %v191
    %193 = vmatmul.f32.gmra.mxu0 %v172
    %v194 = vpop.f32.mrf.mxu0
    %v195 = vadd.f32 0.0, %v194
    %196 = vdwg.mxu0
    %v197 = vld [vmem:[%s4] sm:$0xff]
    %v198 = vperm.slane %v62, 1
    %v200 = vsel %vm102, %v192, 0
    %v203 = vsel %vm102, %v195, 0
    %205 = vmatpush.msra.mxu0 0.0
    %206 = vmatpush.msra.mxu0 0.0
    %207 = vmatpush.msra.mxu0 0.0
    %208 = vmatpush.msra.mxu0 0.0
    %209 = vmatpush.msra.mxu0 0.0
    %210 = vmatpush.msra.mxu0 0.0
    %211 = vmatpush.msra.mxu0 0.0
    %212 = vmatpush.msra.mxu0 0.0
    %213 = vmatpush.msra.mxu0 0.0
    %214 = vmatpush.msra.mxu0 0.0
    %215 = vmatpush.msra.mxu0 0.0
    %216 = vmatpush.msra.mxu0 0.0
    %217 = vmatpush.msra.mxu0 0.0
    %218 = vmatpush.msra.mxu0 0.0
    %219 = vmatpush.msra.mxu0 0.0
    %220 = vmatpush.msra.mxu0 %v197
    %221 = vmatmul.f32.gmra.mxu0 %v200
    %v222 = vpop.f32.mrf.mxu0
    %v223 = vadd.f32 %v198, %v222
    %224 = vmatmul.f32.gmra.mxu0 %v203
    %v225 = vpop.f32.mrf.mxu0
    %v226 = vadd.f32 %v198, %v225
    %227 = vdwg.mxu0
    %v228 = vadd.f32 %v223, %v60
    %v229 = vadd.f32 %v226, %v61
    %v230 = vsel %vm66, %v228, 0.0
    %231 = vadd.xlane.f32.xlu0 %v230
    %v232 = vpop.xlane.xlu0 %231
    %v233 = vsel %vm66, %v229, 0.0
    %234 = vadd.xlane.f32.xlu0 %v233
    %v235 = vpop.xlane.xlu0 %234
    %v236 = vrcp.pop 16.0
    %v237 = vmul.f32 16.0, %v236
    %v238 = vsub.f32 1.0, %v237
    %v239 = vmul.f32 %v236, %v238
    %v240 = vadd.f32 %v236, %v239
    %vm241 = vweird.f32 %v236
    %v242 = vsel %vm241, %v236, %v240
    %v243 = vmul.f32 %v232, %v242
    %v244 = vmul.f32 %v235, %v242
    %v245 = vsub.f32 %v228, %v243
    %v246 = vsub.f32 %v229, %v244
    %v247 = vmul.f32 %v245, %v245
    %v248 = vmul.f32 %v246, %v246
    %v249 = vsel %vm66, %v247, 0.0
    %250 = vadd.xlane.f32.xlu0 %v249
    %v251 = vpop.xlane.xlu0 %250
    %v252 = vsel %vm66, %v248, 0.0
    %253 = vadd.xlane.f32.xlu0 %v252
    %v254 = vpop.xlane.xlu0 %253
    %v255 = vmul.f32 %v251, %v242
    %v256 = vmul.f32 %v254, %v242
    %v257 = vadd.f32 %v255, 1e-05
    %v258 = vadd.f32 %v256, 1e-05
    %v259 = vrsqrt.pop %v257
    %v260 = vmul.f32 %v259, %v257
    %v261 = vmul.f32 %v260, %v259
    %v262 = vmul.f32 0.5, %v261
    %v263 = vsub.f32 1.5, %v262
    %v264 = vmul.f32 %v259, %v263
    %vm265 = vweird.f32 %v257
    %vm266 = vweird.f32 %v259
    %vm267 = vmor %vm265, %vm266
    %v268 = vsel %vm267, %v259, %v264
    %v269 = vrsqrt.pop %v258
    %v270 = vmul.f32 %v269, %v258
    %v271 = vmul.f32 %v270, %v269
    %v272 = vmul.f32 0.5, %v271
    %v273 = vsub.f32 1.5, %v272
    %v274 = vmul.f32 %v269, %v273
    %vm275 = vweird.f32 %v258
    %vm276 = vweird.f32 %v269
    %vm277 = vmor %vm275, %vm276
    %v278 = vsel %vm277, %v269, %v274
    %v279 = vmul.f32 %v245, %v268
    %v280 = vmul.f32 %v246, %v278
    %v281 = vperm.slane %v62, 2
    %v282 = vmul.f32 %v279, %v281
    %v283 = vmul.f32 %v280, %v281
    %v284 = vperm.slane %v62, 3
    %v285 = vadd.f32 %v282, %v284
    %v286 = vadd.f32 %v283, %v284
    %v287 = vld [vmem:[%s5] sm:$0xff]
    %v288 = vld [vmem:[%s5 + $0x8] sm:$0xff]
    %v289 = vperm.slane %v62, 4
    %v291 = vsel %vm66, %v285, 0
    %v294 = vsel %vm66, %v286, 0
    %296 = vmatpush.msra.mxu0 0.0
    %297 = vmatpush.msra.mxu0 0.0
    %298 = vmatpush.msra.mxu0 0.0
    %299 = vmatpush.msra.mxu0 0.0
    %300 = vmatpush.msra.mxu0 0.0
    %301 = vmatpush.msra.mxu0 0.0
    %302 = vmatpush.msra.mxu0 0.0
    %303 = vmatpush.msra.mxu0 0.0
    %304 = vmatpush.msra.mxu0 0.0
    %305 = vmatpush.msra.mxu0 0.0
    %306 = vmatpush.msra.mxu0 0.0
    %307 = vmatpush.msra.mxu0 0.0
    %308 = vmatpush.msra.mxu0 0.0
    %309 = vmatpush.msra.mxu0 0.0
    %310 = vmatpush.msra.mxu0 %v288
    %311 = vmatpush.msra.mxu0 %v287
    %312 = vmatmul.f32.gmra.mxu0 %v291
    %v313 = vpop.f32.mrf.mxu0
    %v314 = vadd.f32 %v289, %v313
    %315 = vmatmul.f32.gmra.mxu0 %v294
    %v316 = vpop.f32.mrf.mxu0
    %v317 = vadd.f32 %v289, %v316
    %318 = vdwg.mxu0
    %v319 = vmax.f32 %v314, 0.0
    %v320 = vmax.f32 %v317, 0.0
    %v321 = vld [vmem:[%s6] sm:$0xff]
    %v322 = vld [vmem:[%s6 + $0x8] sm:$0xff]
    %v323 = vld [vmem:[%s6 + $0x10] sm:$0xff]
    %v324 = vld [vmem:[%s6 + $0x18] sm:$0xff]
    %v325 = vperm.slane %v62, 5
    %vm326 = vcmask 261120
    %v328 = vsel %vm326, %v319, 0
    %v331 = vsel %vm326, %v320, 0
    %333 = vmatpush.msra.mxu0 0.0
    %334 = vmatpush.msra.mxu0 0.0
    %335 = vmatpush.msra.mxu0 0.0
    %336 = vmatpush.msra.mxu0 0.0
    %337 = vmatpush.msra.mxu0 0.0
    %338 = vmatpush.msra.mxu0 0.0
    %339 = vmatpush.msra.mxu0 0.0
    %340 = vmatpush.msra.mxu0 0.0
    %341 = vmatpush.msra.mxu0 0.0
    %342 = vmatpush.msra.mxu0 0.0
    %343 = vmatpush.msra.mxu0 0.0
    %344 = vmatpush.msra.mxu0 0.0
    %345 = vmatpush.msra.mxu0 %v324
    %346 = vmatpush.msra.mxu0 %v323
    %347 = vmatpush.msra.mxu0 %v322
    %348 = vmatpush.msra.mxu0 %v321
    %349 = vmatmul.f32.gmra.mxu0 %v328
    %v350 = vpop.f32.mrf.mxu0
    %v351 = vadd.f32 %v325, %v350
    %352 = vmatmul.f32.gmra.mxu0 %v331
    %v353 = vpop.f32.mrf.mxu0
    %v354 = vadd.f32 %v325, %v353
    %355 = vdwg.mxu0
    %v356 = vadd.f32 %v351, %v285
    %v357 = vadd.f32 %v354, %v286
    %v358 = vsel %vm66, %v356, 0.0
    %359 = vadd.xlane.f32.xlu0 %v358
    %v360 = vpop.xlane.xlu0 %359
    %v361 = vsel %vm66, %v357, 0.0
    %362 = vadd.xlane.f32.xlu0 %v361
    %v363 = vpop.xlane.xlu0 %362
    %v364 = vmul.f32 %v360, %v242
    %v365 = vmul.f32 %v363, %v242
    %v366 = vsub.f32 %v356, %v364
    %v367 = vsub.f32 %v357, %v365
    %v368 = vmul.f32 %v366, %v366
    %v369 = vmul.f32 %v367, %v367
    %v370 = vsel %vm66, %v368, 0.0
    %371 = vadd.xlane.f32.xlu0 %v370
    %v372 = vpop.xlane.xlu0 %371
    %v373 = vsel %vm66, %v369, 0.0
    %374 = vadd.xlane.f32.xlu0 %v373
    %v375 = vpop.xlane.xlu0 %374
    %v376 = vmul.f32 %v372, %v242
    %v377 = vmul.f32 %v375, %v242
    %v378 = vadd.f32 %v376, 1e-05
    %v379 = vadd.f32 %v377, 1e-05
    %v380 = vrsqrt.pop %v378
    %v381 = vmul.f32 %v380, %v378
    %v382 = vmul.f32 %v381, %v380
    %v383 = vmul.f32 0.5, %v382
    %v384 = vsub.f32 1.5, %v383
    %v385 = vmul.f32 %v380, %v384
    %vm386 = vweird.f32 %v378
    %vm387 = vweird.f32 %v380
    %vm388 = vmor %vm386, %vm387
    %v389 = vsel %vm388, %v380, %v385
    %v390 = vrsqrt.pop %v379
    %v391 = vmul.f32 %v390, %v379
    %v392 = vmul.f32 %v391, %v390
    %v393 = vmul.f32 0.5, %v392
    %v394 = vsub.f32 1.5, %v393
    %v395 = vmul.f32 %v390, %v394
    %vm396 = vweird.f32 %v379
    %vm397 = vweird.f32 %v390
    %vm398 = vmor %vm396, %vm397
    %v399 = vsel %vm398, %v390, %v395
    %v400 = vmul.f32 %v366, %v389
    %v401 = vmul.f32 %v367, %v399
    %v402 = vperm.slane %v62, 6
    %v403 = vmul.f32 %v400, %v402
    %v404 = vmul.f32 %v401, %v402
    %v405 = vperm.slane %v62, 7
    %v406 = vadd.f32 %v403, %v405
    %v407 = vadd.f32 %v404, %v405
    %v408 = vld [vmem:[%s12] sm:$0xff]
    %v409 = vld [vmem:[%s8] sm:$0xff]
    %v410 = vld [vmem:[%s8 + $0x8] sm:$0xff]
    %v411 = vperm.slane %v408, 0
    %v413 = vsel %vm66, %v406, 0
    %v416 = vsel %vm66, %v407, 0
    %418 = vmatpush.msra.mxu0 0.0
    %419 = vmatpush.msra.mxu0 0.0
    %420 = vmatpush.msra.mxu0 0.0
    %421 = vmatpush.msra.mxu0 0.0
    %422 = vmatpush.msra.mxu0 0.0
    %423 = vmatpush.msra.mxu0 0.0
    %424 = vmatpush.msra.mxu0 0.0
    %425 = vmatpush.msra.mxu0 0.0
    %426 = vmatpush.msra.mxu0 0.0
    %427 = vmatpush.msra.mxu0 0.0
    %428 = vmatpush.msra.mxu0 0.0
    %429 = vmatpush.msra.mxu0 0.0
    %430 = vmatpush.msra.mxu0 0.0
    %431 = vmatpush.msra.mxu0 0.0
    %432 = vmatpush.msra.mxu0 %v410
    %433 = vmatpush.msra.mxu0 %v409
    %434 = vmatmul.f32.gmra.mxu0 %v413
    %v435 = vpop.f32.mrf.mxu0
    %v436 = vadd.f32 %v411, %v435
    %437 = vmatmul.f32.gmra.mxu0 %v416
    %v438 = vpop.f32.mrf.mxu0
    %v439 = vadd.f32 %v411, %v438
    %440 = vdwg.mxu0
    %443 = vrot.lane.b32.xlu0 %v436, 120
    %v444 = vpop.permute.xlu0 %443
    %445 = vrot.lane.b32.xlu0 %v439, 120
    %v446 = vpop.permute.xlu0 %445
    %v447 = vsel %vm102, %v436, 0
    %v449 = vsel %vm102, %v439, 0
    %v451 = vsel %vm102, %v444, 0
    %v453 = vsel %vm102, %v446, 0
    %455 = vmatpush.xpose.msra.mxu0 0.0
    %456 = vmatpush.xpose.msra.mxu0 0.0
    %457 = vmatpush.xpose.msra.mxu0 0.0
    %458 = vmatpush.xpose.msra.mxu0 0.0
    %459 = vmatpush.xpose.msra.mxu0 0.0
    %460 = vmatpush.xpose.msra.mxu0 0.0
    %461 = vmatpush.xpose.msra.mxu0 0.0
    %462 = vmatpush.xpose.msra.mxu0 0.0
    %463 = vmatpush.xpose.msra.mxu0 0.0
    %464 = vmatpush.xpose.msra.mxu0 0.0
    %465 = vmatpush.xpose.msra.mxu0 0.0
    %466 = vmatpush.xpose.msra.mxu0 0.0
    %467 = vmatpush.xpose.msra.mxu0 0.0
    %468 = vmatpush.xpose.msra.mxu0 0.0
    %469 = vmatpush.xpose.msra.mxu0 %v453
    %470 = vmatpush.xpose.msra.mxu0 %v451
    %471 = vmatmul.f32.gmra.mxu0 %v447
    %v472 = vpop.f32.mrf.mxu0
    %v473 = vadd.f32 0.0, %v472
    %474 = vmatmul.f32.gmra.mxu0 %v449
    %v475 = vpop.f32.mrf.mxu0
    %v476 = vadd.f32 0.0, %v475
    %477 = vdwg.mxu0
    %v478 = vmul.f32 %v473, 0.35355338
    %v479 = vmul.f32 %v476, 0.35355338
    %v480 = vadd.f32 %v478, %v58
    %v481 = vadd.f32 %v479, %v59
    %v482 = vsel %vm66, %v480, -inf
    %483 = vmax.xlane.f32.xlu0 %v482
    %v484 = vpop.xlane.xlu0 %483
    %v485 = vsel %vm66, %v481, -inf
    %486 = vmax.xlane.f32.xlu0 %v485
    %v487 = vpop.xlane.xlu0 %486
    %v488 = vsub.f32 %v480, %v484
    %v489 = vsub.f32 %v481, %v487
    %v490 = vmul.f32 %v488, 1.442695
    %v491 = vpow.pop %v490
    %v492 = vmul.f32 %v489, 1.442695
    %v493 = vpow.pop %v492
    %v494 = vmul.f32 %v491, %v54
    %v495 = vmul.f32 %v493, %v55
    %v496 = vsel %vm66, %v494, 0.0
    %497 = vadd.xlane.f32.xlu0 %v496
    %v498 = vpop.xlane.xlu0 %497
    %v499 = vsel %vm66, %v495, 0.0
    %500 = vadd.xlane.f32.xlu0 %v499
    %v501 = vpop.xlane.xlu0 %500
    %v502 = vrcp.pop %v498
    %v503 = vrcp.pop %v501
    %v504 = vmul.f32 %v494, %v502
    %v505 = vmul.f32 %v495, %v503
    %506 = vrot.lane.b32.xlu0 %v436, 112
    %v507 = vpop.permute.xlu0 %506
    %508 = vrot.lane.b32.xlu0 %v439, 112
    %v509 = vpop.permute.xlu0 %508
    %v513 = vsel %vm66, %v504, 0
    %v516 = vsel %vm66, %v505, 0
    %518 = vmatpush.msra.mxu0 0.0
    %519 = vmatpush.msra.mxu0 0.0
    %520 = vmatpush.msra.mxu0 0.0
    %521 = vmatpush.msra.mxu0 0.0
    %522 = vmatpush.msra.mxu0 0.0
    %523 = vmatpush.msra.mxu0 0.0
    %524 = vmatpush.msra.mxu0 0.0
    %525 = vmatpush.msra.mxu0 0.0
    %526 = vmatpush.msra.mxu0 0.0
    %527 = vmatpush.msra.mxu0 0.0
    %528 = vmatpush.msra.mxu0 0.0
    %529 = vmatpush.msra.mxu0 0.0
    %530 = vmatpush.msra.mxu0 0.0
    %531 = vmatpush.msra.mxu0 0.0
    %532 = vmatpush.msra.mxu0 %v509
    %533 = vmatpush.msra.mxu0 %v507
    %534 = vmatmul.f32.gmra.mxu0 %v513
    %v535 = vpop.f32.mrf.mxu0
    %v536 = vadd.f32 0.0, %v535
    %537 = vmatmul.f32.gmra.mxu0 %v516
    %v538 = vpop.f32.mrf.mxu0
    %v539 = vadd.f32 0.0, %v538
    %540 = vdwg.mxu0
    %v541 = vld [vmem:[%s9] sm:$0xff]
    %v542 = vperm.slane %v408, 1
    %v544 = vsel %vm102, %v536, 0
    %v547 = vsel %vm102, %v539, 0
    %549 = vmatpush.msra.mxu0 0.0
    %550 = vmatpush.msra.mxu0 0.0
    %551 = vmatpush.msra.mxu0 0.0
    %552 = vmatpush.msra.mxu0 0.0
    %553 = vmatpush.msra.mxu0 0.0
    %554 = vmatpush.msra.mxu0 0.0
    %555 = vmatpush.msra.mxu0 0.0
    %556 = vmatpush.msra.mxu0 0.0
    %557 = vmatpush.msra.mxu0 0.0
    %558 = vmatpush.msra.mxu0 0.0
    %559 = vmatpush.msra.mxu0 0.0
    %560 = vmatpush.msra.mxu0 0.0
    %561 = vmatpush.msra.mxu0 0.0
    %562 = vmatpush.msra.mxu0 0.0
    %563 = vmatpush.msra.mxu0 0.0
    %564 = vmatpush.msra.mxu0 %v541
    %565 = vmatmul.f32.gmra.mxu0 %v544
    %v566 = vpop.f32.mrf.mxu0
    %v567 = vadd.f32 %v542, %v566
    %568 = vmatmul.f32.gmra.mxu0 %v547
    %v569 = vpop.f32.mrf.mxu0
    %v570 = vadd.f32 %v542, %v569
    %571 = vdwg.mxu0
    %v572 = vadd.f32 %v567, %v406
    %v573 = vadd.f32 %v570, %v407
    %v574 = vsel %vm66, %v572, 0.0
    %575 = vadd.xlane.f32.xlu0 %v574
    %v576 = vpop.xlane.xlu0 %575
    %v577 = vsel %vm66, %v573, 0.0
    %578 = vadd.xlane.f32.xlu0 %v577
    %v579 = vpop.xlane.xlu0 %578
    %v580 = vmul.f32 %v576, %v242
    %v581 = vmul.f32 %v579, %v242
    %v582 = vsub.f32 %v572, %v580
    %v583 = vsub.f32 %v573, %v581
    %v584 = vmul.f32 %v582, %v582
    %v585 = vmul.f32 %v583, %v583
    %v586 = vsel %vm66, %v584, 0.0
    %587 = vadd.xlane.f32.xlu0 %v586
    %v588 = vpop.xlane.xlu0 %587
    %v589 = vsel %vm66, %v585, 0.0
    %590 = vadd.xlane.f32.xlu0 %v589
    %v591 = vpop.xlane.xlu0 %590
    %v592 = vmul.f32 %v588, %v242
    %v593 = vmul.f32 %v591, %v242
    %v594 = vadd.f32 %v592, 1e-05
    %v595 = vadd.f32 %v593, 1e-05
    %v596 = vrsqrt.pop %v594
    %v597 = vmul.f32 %v596, %v594
    %v598 = vmul.f32 %v597, %v596
    %v599 = vmul.f32 0.5, %v598
    %v600 = vsub.f32 1.5, %v599
    %v601 = vmul.f32 %v596, %v600
    %vm602 = vweird.f32 %v594
    %vm603 = vweird.f32 %v596
    %vm604 = vmor %vm602, %vm603
    %v605 = vsel %vm604, %v596, %v601
    %v606 = vrsqrt.pop %v595
    %v607 = vmul.f32 %v606, %v595
    %v608 = vmul.f32 %v607, %v606
    %v609 = vmul.f32 0.5, %v608
    %v610 = vsub.f32 1.5, %v609
    %v611 = vmul.f32 %v606, %v610
    %vm612 = vweird.f32 %v595
    %vm613 = vweird.f32 %v606
    %vm614 = vmor %vm612, %vm613
    %v615 = vsel %vm614, %v606, %v611
    %v616 = vmul.f32 %v582, %v605
    %v617 = vmul.f32 %v583, %v615
    %v618 = vperm.slane %v408, 2
    %v619 = vmul.f32 %v616, %v618
    %v620 = vmul.f32 %v617, %v618
    %v621 = vperm.slane %v408, 3
    %v622 = vadd.f32 %v619, %v621
    %v623 = vadd.f32 %v620, %v621
    %v624 = vld [vmem:[%s10] sm:$0xff]
    %v625 = vld [vmem:[%s10 + $0x8] sm:$0xff]
    %v626 = vperm.slane %v408, 4
    %v628 = vsel %vm66, %v622, 0
    %v631 = vsel %vm66, %v623, 0
    %633 = vmatpush.msra.mxu0 0.0
    %634 = vmatpush.msra.mxu0 0.0
    %635 = vmatpush.msra.mxu0 0.0
    %636 = vmatpush.msra.mxu0 0.0
    %637 = vmatpush.msra.mxu0 0.0
    %638 = vmatpush.msra.mxu0 0.0
    %639 = vmatpush.msra.mxu0 0.0
    %640 = vmatpush.msra.mxu0 0.0
    %641 = vmatpush.msra.mxu0 0.0
    %642 = vmatpush.msra.mxu0 0.0
    %643 = vmatpush.msra.mxu0 0.0
    %644 = vmatpush.msra.mxu0 0.0
    %645 = vmatpush.msra.mxu0 0.0
    %646 = vmatpush.msra.mxu0 0.0
    %647 = vmatpush.msra.mxu0 %v625
    %648 = vmatpush.msra.mxu0 %v624
    %649 = vmatmul.f32.gmra.mxu0 %v628
    %v650 = vpop.f32.mrf.mxu0
    %v651 = vadd.f32 %v626, %v650
    %652 = vmatmul.f32.gmra.mxu0 %v631
    %v653 = vpop.f32.mrf.mxu0
    %v654 = vadd.f32 %v626, %v653
    %655 = vdwg.mxu0
    %v656 = vmax.f32 %v651, 0.0
    %v657 = vmax.f32 %v654, 0.0
    %v658 = vld [vmem:[%s11] sm:$0xff]
    %v659 = vld [vmem:[%s11 + $0x8] sm:$0xff]
    %v660 = vld [vmem:[%s11 + $0x10] sm:$0xff]
    %v661 = vld [vmem:[%s11 + $0x18] sm:$0xff]
    %v662 = vperm.slane %v408, 5
    %v664 = vsel %vm326, %v656, 0
    %v667 = vsel %vm326, %v657, 0
    %669 = vmatpush.msra.mxu0 0.0
    %670 = vmatpush.msra.mxu0 0.0
    %671 = vmatpush.msra.mxu0 0.0
    %672 = vmatpush.msra.mxu0 0.0
    %673 = vmatpush.msra.mxu0 0.0
    %674 = vmatpush.msra.mxu0 0.0
    %675 = vmatpush.msra.mxu0 0.0
    %676 = vmatpush.msra.mxu0 0.0
    %677 = vmatpush.msra.mxu0 0.0
    %678 = vmatpush.msra.mxu0 0.0
    %679 = vmatpush.msra.mxu0 0.0
    %680 = vmatpush.msra.mxu0 0.0
    %681 = vmatpush.msra.mxu0 %v661
    %682 = vmatpush.msra.mxu0 %v660
    %683 = vmatpush.msra.mxu0 %v659
    %684 = vmatpush.msra.mxu0 %v658
    %685 = vmatmul.f32.gmra.mxu0 %v664
    %v686 = vpop.f32.mrf.mxu0
    %v687 = vadd.f32 %v662, %v686
    %688 = vmatmul.f32.gmra.mxu0 %v667
    %v689 = vpop.f32.mrf.mxu0
    %v690 = vadd.f32 %v662, %v689
    %691 = vdwg.mxu0
    %v692 = vadd.f32 %v687, %v622
    %v693 = vadd.f32 %v690, %v623
    %v694 = vsel %vm66, %v692, 0.0
    %695 = vadd.xlane.f32.xlu0 %v694
    %v696 = vpop.xlane.xlu0 %695
    %v697 = vsel %vm66, %v693, 0.0
    %698 = vadd.xlane.f32.xlu0 %v697
    %v699 = vpop.xlane.xlu0 %698
    %v700 = vmul.f32 %v696, %v242
    %v701 = vmul.f32 %v699, %v242
    %v702 = vsub.f32 %v692, %v700
    %v703 = vsub.f32 %v693, %v701
    %v704 = vmul.f32 %v702, %v702
    %v705 = vmul.f32 %v703, %v703
    %v706 = vsel %vm66, %v704, 0.0
    %707 = vadd.xlane.f32.xlu0 %v706
    %v708 = vpop.xlane.xlu0 %707
    %v709 = vsel %vm66, %v705, 0.0
    %710 = vadd.xlane.f32.xlu0 %v709
    %v711 = vpop.xlane.xlu0 %710
    %v712 = vmul.f32 %v708, %v242
    %v713 = vmul.f32 %v711, %v242
    %v714 = vadd.f32 %v712, 1e-05
    %v715 = vadd.f32 %v713, 1e-05
    %v716 = vrsqrt.pop %v714
    %v717 = vmul.f32 %v716, %v714
    %v718 = vmul.f32 %v717, %v716
    %v719 = vmul.f32 0.5, %v718
    %v720 = vsub.f32 1.5, %v719
    %v721 = vmul.f32 %v716, %v720
    %vm722 = vweird.f32 %v714
    %vm723 = vweird.f32 %v716
    %vm724 = vmor %vm722, %vm723
    %v725 = vsel %vm724, %v716, %v721
    %v726 = vrsqrt.pop %v715
    %v727 = vmul.f32 %v726, %v715
    %v728 = vmul.f32 %v727, %v726
    %v729 = vmul.f32 0.5, %v728
    %v730 = vsub.f32 1.5, %v729
    %v731 = vmul.f32 %v726, %v730
    %vm732 = vweird.f32 %v715
    %vm733 = vweird.f32 %v726
    %vm734 = vmor %vm732, %vm733
    %v735 = vsel %vm734, %v726, %v731
    %v736 = vmul.f32 %v702, %v725
    %v737 = vmul.f32 %v703, %v735
    %v738 = vperm.slane %v408, 6
    %v739 = vmul.f32 %v736, %v738
    %v740 = vmul.f32 %v737, %v738
    %v741 = vperm.slane %v408, 7
    %v742 = vadd.f32 %v739, %v741
    %v743 = vadd.f32 %v740, %v741
    %v744 = vld [vmem:[%s15] sm:$0xff]
    %v745 = vld [vmem:[%s1] sm:$0xff]
    %v746 = vld [vmem:[%s1 + $0x8] sm:$0xff]
    %v748 = vrot.slane %v744, 6
    %s749 = vtos %v748
    %v750 = vstv %s749
    %v752 = vmul.f32 %v750, %v742
    %v753 = vmul.f32 %v750, %v743
    %v755 = vsel %vm66, %v745, 0
    %v758 = vsel %vm66, %v746, 0
    %760 = vmatpush.msra.mxu0 0.0
    %761 = vmatpush.msra.mxu0 0.0
    %762 = vmatpush.msra.mxu0 0.0
    %763 = vmatpush.msra.mxu0 0.0
    %764 = vmatpush.msra.mxu0 0.0
    %765 = vmatpush.msra.mxu0 0.0
    %766 = vmatpush.msra.mxu0 0.0
    %767 = vmatpush.msra.mxu0 0.0
    %768 = vmatpush.msra.mxu0 0.0
    %769 = vmatpush.msra.mxu0 0.0
    %770 = vmatpush.msra.mxu0 0.0
    %771 = vmatpush.msra.mxu0 0.0
    %772 = vmatpush.msra.mxu0 0.0
    %773 = vmatpush.msra.mxu0 0.0
    %774 = vmatpush.msra.mxu0 %v743
    %775 = vmatpush.msra.mxu0 %v742
    %776 = vmatmul.f32.gmra.mxu0 %v755
    %v777 = vpop.f32.mrf.mxu0
    %v778 = vadd.f32 %v752, %v777
    %779 = vmatmul.f32.gmra.mxu0 %v758
    %v780 = vpop.f32.mrf.mxu0
    %v781 = vadd.f32 %v753, %v780
    %782 = vdwg.mxu0
    %v783 = vld [vmem:[%s13] sm:$0xff]
    %v784 = vld [vmem:[%s13 + $0x8] sm:$0xff]
    %v785 = vperm.slane %v744, 0
    %v787 = vsel %vm66, %v778, 0
    %v790 = vsel %vm66, %v781, 0
    %792 = vmatpush.msra.mxu0 0.0
    %793 = vmatpush.msra.mxu0 0.0
    %794 = vmatpush.msra.mxu0 0.0
    %795 = vmatpush.msra.mxu0 0.0
    %796 = vmatpush.msra.mxu0 0.0
    %797 = vmatpush.msra.mxu0 0.0
    %798 = vmatpush.msra.mxu0 0.0
    %799 = vmatpush.msra.mxu0 0.0
    %800 = vmatpush.msra.mxu0 0.0
    %801 = vmatpush.msra.mxu0 0.0
    %802 = vmatpush.msra.mxu0 0.0
    %803 = vmatpush.msra.mxu0 0.0
    %804 = vmatpush.msra.mxu0 0.0
    %805 = vmatpush.msra.mxu0 0.0
    %806 = vmatpush.msra.mxu0 %v784
    %807 = vmatpush.msra.mxu0 %v783
    %808 = vmatmul.f32.gmra.mxu0 %v787
    %v809 = vpop.f32.mrf.mxu0
    %v810 = vadd.f32 %v785, %v809
    %811 = vmatmul.f32.gmra.mxu0 %v790
    %v812 = vpop.f32.mrf.mxu0
    %v813 = vadd.f32 %v785, %v812
    %814 = vdwg.mxu0
    %v815 = vsel %vm326, %v810, 0.0
    %v816 = vsel %vm326, %v813, 0.0
    %v817 = vadd.f32 %v815, %v816
    %v818 = vrot.slane %v817, 4
    %v819 = vadd.f32 %v817, %v818
    %v820 = vrot.slane %v819, 2
    %v821 = vadd.f32 %v819, %v820
    %v822 = vrot.slane %v821, 1
    %v823 = vadd.f32 %v821, %v822
    %v824 = vmul.f32 %v823, %v242
    %v825 = vsub.f32 %v810, %v824
    %v826 = vsub.f32 %v813, %v824
    %v827 = vmul.f32 %v825, %v825
    %v828 = vmul.f32 %v826, %v826
    %v829 = vsel %vm326, %v827, 0.0
    %v830 = vsel %vm326, %v828, 0.0
    %v831 = vadd.f32 %v829, %v830
    %v832 = vrot.slane %v831, 4
    %v833 = vadd.f32 %v831, %v832
    %v834 = vrot.slane %v833, 2
    %v835 = vadd.f32 %v833, %v834
    %v836 = vrot.slane %v835, 1
    %v837 = vadd.f32 %v835, %v836
    %v838 = vmul.f32 %v837, %v242
    %v839 = vadd.f32 %v838, 1e-05
    %v840 = vrsqrt.pop %v839
    %v841 = vmul.f32 %v840, %v839
    %v842 = vmul.f32 %v841, %v840
    %v843 = vmul.f32 0.5, %v842
    %v844 = vsub.f32 1.5, %v843
    %v845 = vmul.f32 %v840, %v844
    %vm846 = vweird.f32 %v839
    %vm847 = vweird.f32 %v840
    %vm848 = vmor %vm846, %vm847
    %v849 = vsel %vm848, %v840, %v845
    %v850 = vmul.f32 %v825, %v849
    %v851 = vmul.f32 %v826, %v849
    %v852 = vperm.slane %v744, 1
    %v853 = vmul.f32 %v850, %v852
    %v854 = vmul.f32 %v851, %v852
    %v855 = vperm.slane %v744, 2
    %v856 = vadd.f32 %v853, %v855
    %v857 = vadd.f32 %v854, %v855
    %v858 = vmax.f32 %v856, 0.0
    %v859 = vmax.f32 %v857, 0.0
    %v860 = vld [vmem:[%s14] sm:$0xff]
    %v861 = vld [vmem:[%s14 + $0x8] sm:$0xff]
    %v862 = vld [vmem:[%s14 + $0x10] sm:$0xff]
    %v863 = vld [vmem:[%s14 + $0x18] sm:$0xff]
    %v864 = vperm.slane %v744, 3
    %v866 = vsel %vm326, %v858, 0
    %v869 = vsel %vm326, %v859, 0
    %871 = vmatpush.msra.mxu0 0.0
    %872 = vmatpush.msra.mxu0 0.0
    %873 = vmatpush.msra.mxu0 0.0
    %874 = vmatpush.msra.mxu0 0.0
    %875 = vmatpush.msra.mxu0 0.0
    %876 = vmatpush.msra.mxu0 0.0
    %877 = vmatpush.msra.mxu0 0.0
    %878 = vmatpush.msra.mxu0 0.0
    %879 = vmatpush.msra.mxu0 0.0
    %880 = vmatpush.msra.mxu0 0.0
    %881 = vmatpush.msra.mxu0 0.0
    %882 = vmatpush.msra.mxu0 0.0
    %883 = vmatpush.msra.mxu0 %v863
    %884 = vmatpush.msra.mxu0 %v862
    %885 = vmatpush.msra.mxu0 %v861
    %886 = vmatpush.msra.mxu0 %v860
    %887 = vmatmul.f32.gmra.mxu0 %v866
    %v888 = vpop.f32.mrf.mxu0
    %v889 = vadd.f32 %v864, %v888
    %890 = vmatmul.f32.gmra.mxu0 %v869
    %v891 = vpop.f32.mrf.mxu0
    %v892 = vadd.f32 %v864, %v891
    %893 = vdwg.mxu0
    %v894 = vsel %vm66, %v889, 0.0
    %v895 = vsel %vm66, %v892, 0.0
    %v896 = vadd.f32 %v894, %v895
    %v897 = vrot.slane %v896, 4
    %v898 = vadd.f32 %v896, %v897
    %v899 = vrot.slane %v898, 2
    %v900 = vadd.f32 %v898, %v899
    %v901 = vrot.slane %v900, 1
    %v902 = vadd.f32 %v900, %v901
    %v903 = vmul.f32 %v902, %v242
    %v904 = vsub.f32 %v889, %v903
    %v905 = vsub.f32 %v892, %v903
    %v906 = vmul.f32 %v904, %v904
    %v907 = vmul.f32 %v905, %v905
    %v908 = vsel %vm66, %v906, 0.0
    %v909 = vsel %vm66, %v907, 0.0
    %v910 = vadd.f32 %v908, %v909
    %v911 = vrot.slane %v910, 4
    %v912 = vadd.f32 %v910, %v911
    %v913 = vrot.slane %v912, 2
    %v914 = vadd.f32 %v912, %v913
    %v915 = vrot.slane %v914, 1
    %v916 = vadd.f32 %v914, %v915
    %v917 = vmul.f32 %v916, %v242
    %v918 = vadd.f32 %v917, 1e-05
    %v919 = vrsqrt.pop %v918
    %v920 = vmul.f32 %v919, %v918
    %v921 = vmul.f32 %v920, %v919
    %v922 = vmul.f32 0.5, %v921
    %v923 = vsub.f32 1.5, %v922
    %v924 = vmul.f32 %v919, %v923
    %vm925 = vweird.f32 %v918
    %vm926 = vweird.f32 %v919
    %vm927 = vmor %vm925, %vm926
    %v928 = vsel %vm927, %v919, %v924
    %v929 = vmul.f32 %v904, %v928
    %v930 = vmul.f32 %v905, %v928
    %v931 = vperm.slane %v744, 4
    %v932 = vmul.f32 %v929, %v931
    %v933 = vmul.f32 %v930, %v931
    %v934 = vperm.slane %v744, 5
    %v935 = vadd.f32 %v932, %v934
    %v936 = vadd.f32 %v933, %v934
    %v937 = vmax.f32 %v935, 0.0
    %v938 = vmax.f32 %v936, 0.0
    %939 = vst.msk [vmem:[#allocation2] sm:$0xff] %vm66, %v937
    %940 = vst.msk [vmem:[#allocation2 + $0x8] sm:$0xff] %vm66, %v938
    // Predicated region
    $region66: #{t_g_block_forward.1} parent=1 // pred_check
      _
    $region67: #{t_g_block_forward.1} parent=1 // pred_check_branch
      %942 = sbr.rel (0) target = $region69
    $region68: #{t_g_block_forward.1} parent=1 // pred_region
      %944 = vsyncadd [#allocation3], 0
      %s945 = sshll.u32 [#allocation2], 4
      %s946 = int_to_ptr.vmem [resolvable:$true] %s945
      %s947 = sshll.u32 %s16, 4
      %s948 = int_to_ptr.hbm [resolvable:$true] %s947
      %953 = dma.vmem_to_hbm [thread:$0]  %s946, 256, %s948, [#allocation3], 128, 128, 8
    $region69: #{t_g_block_forward.1} parent=1 // pred_fallthru
      _
    // Predicated region
    $region70: #{t_g_block_forward.1} parent=1 // pred_check
      _
    $region71: #{t_g_block_forward.1} parent=1 // pred_check_branch
      %955 = sbr.rel (0) target = $region73
    $region72: #{t_g_block_forward.1} parent=1 // pred_region
      %957 = dma.done [#allocation3], 256
    $region73: #{t_g_block_forward.1} parent=1 // pred_fallthru
      _
    %958 = vsyncpa [#allocation3], 1

</llo_original>
